<compile_context>
chip_gen: v6e
topology: v6e:2x2x1
jax: 0.10.0
libtpu: 0.0.40
codegen_flags: <defaults>
</compile_context>

<pallas_src>
import functools

import jax
import jax.numpy as jnp
import numpy as np
from jax.experimental import pallas as pl
from jax.experimental.pallas import tpu as pltpu


# -----------------------------------------------------------------------------
# Pallas kernel: hoisted projections + fused bidirectional recurrences +
# tap-grouped text-CNN matmul + fused Linear/Softmax head.  grid=(), all VMEM.
# -----------------------------------------------------------------------------
def _model_kernel(S, B, H,
                  x_ref,                     # ((S+2)*B, D) time-major flat embeddings, 2 zero-padded steps
                  w0_ref, w1_ref,            # (D, 2H), (2H, 2H) input proj [fwd | bwd]
                  whh0_ref, whh1_ref,        # (2H, 2H)   block-diagonal recurrent weights
                  b0_ref, b1_ref,            # (1, 2H)    pre-summed b_ih + b_hh [fwd | bwd]
                  wconv_ref,                 # (D, 15)    tap-grouped conv weights
                  cb_ref,                    # (1, 3)     conv biases
                  mask_ref,                  # (L1*B, 3)  1.0 where time step valid for that branch
                  wcls_ref, bcls_ref,        # (2H+3, 3), (1, 3)
                  y_ref,                     # (B, 3)     softmax output
                  zbuf_ref, out0_ref):       # (S*B, 2H)  scratch buffers
    f32 = jnp.float32
    H2 = 2 * H
    SB = S * B
    x_rnn = x_ref[0:SB, :]                                       # drop the conv zero-pad rows

    # ---- hoisted layer-0 input projection, both directions in one matmul -----------
    p0 = jnp.dot(x_rnn, w0_ref[...], preferred_element_type=f32) + b0_ref[...]   # (S*B, 2H)

    # Stage fused step inputs: zbuf row-block s = [fwd proj @ time s | bwd proj @ time
    # S-1-s] so each recurrence step reads one contiguous (B, 2H) slab (off crit path).
    zbuf_ref[:, 0:H] = p0[:, 0:H]
    for s in range(S):
        zbuf_ref[s * B:(s + 1) * B, H:H2] = p0[(S - 1 - s) * B:(S - s) * B, H:H2]

    # ---- layer-0 fused bidirectional recurrence (fully unrolled, S static) ----------
    # TODO(synk): weight-stationary MXU (pltpu.matmul_push_rhs/acc_lhs/pop) if the
    #   bundle dump shows per-step RHS re-latching on this serial chain.
    whh0 = whh0_ref[...]
    h = jnp.zeros((B, H2), f32)
    for s in range(S):
        z = zbuf_ref[s * B:(s + 1) * B, :]                       # (B, 2H)
        h = jnp.tanh(z + jnp.dot(h, whh0, preferred_element_type=f32))
        out0_ref[s * B:(s + 1) * B, 0:H] = h[:, 0:H]             # fwd output, time s
        out0_ref[(S - 1 - s) * B:(S - s) * B, H:H2] = h[:, H:H2]  # bwd output, time S-1-s

    # ---- hoisted layer-1 input projection from the lane-dense (S*B, 2H) buffer ------
    p1 = jnp.dot(out0_ref[...], w1_ref[...], preferred_element_type=f32) + b1_ref[...]
    zbuf_ref[:, 0:H] = p1[:, 0:H]
    for s in range(S):
        zbuf_ref[s * B:(s + 1) * B, H:H2] = p1[(S - 1 - s) * B:(S - s) * B, H:H2]

    # ---- layer-1 fused recurrence + running sum (AvgPool1d over time) ---------------
    whh1 = whh1_ref[...]
    h1 = jnp.zeros((B, H2), f32)
    acc = jnp.zeros((B, H2), f32)
    for s in range(S):
        z = zbuf_ref[s * B:(s + 1) * B, :]
        h1 = jnp.tanh(z + jnp.dot(h1, whh1, preferred_element_type=f32))
        acc = acc + h1            # fwd half covers all t, bwd half covers all t
    pool = acc * (1.0 / S)        # (B, 2H)

    # ---- text-CNN: one matmul (tap-grouped weights), shifted 3-lane adds covering
    # all three branches, ReLU, robust -inf mask, one max-fold chain over time --------
    L1 = S - 3 + 1                                                # longest conv output
    pc = jnp.dot(x_ref[...], wconv_ref[...], preferred_element_type=f32)   # ((S+2)*B, 15)
    accc = pc[0:L1 * B, 0:3]                                      # tap j=0, all branches
    for j in range(1, 5):                                         # taps j=1..4 (static)
        accc = accc + pc[j * B:j * B + L1 * B, 3 * j:3 * j + 3]
    r = jnp.maximum(accc + cb_ref[...], 0.0)                      # (L1*B, 3), rows t*B+b
    r = jnp.where(mask_ref[...] > 0.5, r, -jnp.inf)               # invalid (t, branch) -> -inf
    cf = r[0:B, :]                                                # per-batch max over time
    for t in range(1, L1):
        cf = jnp.maximum(cf, r[t * B:(t + 1) * B, :])             # (B, 3) = [c1, c2, c3]

    # ---- classifier Linear(2H+3, 3) + Softmax; feature order (c1, c2, c3, pool) -----
    wcls = wcls_ref[...]
    logits = (cf[:, 0:1] * wcls[0:1, :] + cf[:, 1:2] * wcls[1:2, :] + cf[:, 2:3] * wcls[2:3, :]
              + jnp.dot(pool, wcls[3:, :], preferred_element_type=f32)
              + bcls_ref[...])
    logits = logits - jnp.max(logits, axis=-1, keepdims=True)
    e = jnp.exp(logits)
    y_ref[...] = e / jnp.sum(e, axis=-1, keepdims=True)


# -----------------------------------------------------------------------------
# Call-invariant weight repacking, hoisted OUT of the forward path (do once).
# -----------------------------------------------------------------------------
def pack_params(p, sentence_length, batch):
    S, B = sentence_length, batch
    D = p['emb'].shape[1]
    H = p['w_hh'].shape[-1]
    H2 = 2 * H

    # Input-to-hidden weights, both directions side by side (pre-transposed for x @ W).
    w0cat = jnp.concatenate([p['w_ih_l0'][0].T, p['w_ih_l0'][1].T], axis=1)   # (D, 2H)
    w1cat = jnp.concatenate([p['w_ih_l1'][0].T, p['w_ih_l1'][1].T], axis=1)   # (2H, 2H)

    def block_diag_t(wf, wb):          # block-diagonal of transposed recurrent weights
        m = jnp.zeros((H2, H2), jnp.float32)
        m = m.at[:H, :H].set(wf.T)
        return m.at[H:, H:].set(wb.T)

    whh0_bd = block_diag_t(p['w_hh'][0, 0], p['w_hh'][0, 1])
    whh1_bd = block_diag_t(p['w_hh'][1, 0], p['w_hh'][1, 1])

    b_sum = p['b_ih'] + p['b_hh']                                  # (2, 2, H)
    b0 = jnp.concatenate([b_sum[0, 0], b_sum[0, 1]]).reshape(1, H2)
    b1 = jnp.concatenate([b_sum[1, 0], b_sum[1, 1]]).reshape(1, H2)

    # Tap-grouped conv weights: group j (j=0..4) = [w1[j]|w2[j]|w3[j]], zeros where the
    # branch has no tap j.  Shape (D, 15).
    ws = [p['conv1_w'], p['conv2_w'], p['conv3_w']]                # kernel sizes 3, 4, 5
    zero_col = jnp.zeros((D,), jnp.float32)
    cols = []
    for j in range(5):
        for w in ws:
            cols.append(w[j].astype(jnp.float32) if j < w.shape[0] else zero_col)
    wconv15 = jnp.stack(cols, axis=1)                              # (D, 15)
    cbias = jnp.stack([p['conv1_b'], p['conv2_b'], p['conv3_b']]).reshape(1, 3).astype(jnp.float32)

    # Conv validity mask: row t*B+b, column = branch; 1.0 iff t < S-k+1 for that branch.
    L_k = np.array([S - 3 + 1, S - 4 + 1, S - 5 + 1])
    L1 = int(L_k[0])
    t_idx = np.repeat(np.arange(L1), B)                            # (L1*B,)
    convmask = jnp.asarray((t_idx[:, None] < L_k[None, :]).astype(np.float32))   # (L1*B, 3)

    return {
        'emb': p['emb'],
        'w0cat': w0cat, 'w1cat': w1cat,
        'whh0': whh0_bd, 'whh1': whh1_bd,
        'b0': b0, 'b1': b1,
        'wconv': wconv15, 'cbias': cbias, 'convmask': convmask,
        'wcls_t': p['cls_w'].T, 'bcls': p['cls_b'].reshape(1, 3),
    }


# -----------------------------------------------------------------------------
# Forward wrapper: embedding gather + time-major flatten + zero pad, one pallas_call.
# -----------------------------------------------------------------------------
def my_model_forward(tokens, pk):
    B, S = tokens.shape
    D = pk['emb'].shape[1]
    H2 = pk['whh0'].shape[0]
    H = H2 // 2

    emb = pk['emb'][tokens].astype(jnp.float32)                    # (B, S, D)
    x_flat = jnp.transpose(emb, (1, 0, 2)).reshape(S * B, D)       # row t*B + b (time-major)
    # Two zero-padded time steps so every shifted conv-tap slice stays in-bounds.
    x_pad = jnp.concatenate([x_flat, jnp.zeros((2 * B, D), jnp.float32)], axis=0)

    vmem = pl.BlockSpec(memory_space=pltpu.MemorySpace.VMEM)

    return pl.pallas_call(
        functools.partial(_model_kernel, S, B, H),
        out_shape=jax.ShapeDtypeStruct((B, 3), jnp.float32),
        in_specs=[vmem] * 12,
        out_specs=vmem,
        scratch_shapes=[pltpu.VMEM((S * B, H2), jnp.float32),      # staged step inputs
                        pltpu.VMEM((S * B, H2), jnp.float32)],     # layer-0 outputs
    )(x_pad, pk['w0cat'], pk['w1cat'], pk['whh0'], pk['whh1'], pk['b0'], pk['b1'],
      pk['wconv'], pk['cbias'], pk['convmask'], pk['wcls_t'], pk['bcls'])


# -----------------------------------------------------------------------------
# Pure-JAX reference (same math, no Pallas) for correctness checking.
# -----------------------------------------------------------------------------
def reference_forward(tokens, p):
    B, S = tokens.shape
    H = p['w_hh'].shape[-1]
    emb = p['emb'][tokens].astype(jnp.float32)            # (B, S, D)

    def run_dir(x_in, w_ih, w_hh, b_ih, b_hh, reverse):
        h = jnp.zeros((B, H), jnp.float32)
        outs = [None] * S
        order = range(S - 1, -1, -1) if reverse else range(S)
        for t in order:
            h = jnp.tanh(x_in[:, t, :] @ w_ih.T + h @ w_hh.T + b_ih + b_hh)
            outs[t] = h
        return jnp.stack(outs, axis=1)                    # (B, S, H)

    o0f = run_dir(emb, p['w_ih_l0'][0], p['w_hh'][0, 0], p['b_ih'][0, 0], p['b_hh'][0, 0], False)
    o0b = run_dir(emb, p['w_ih_l0'][1], p['w_hh'][0, 1], p['b_ih'][0, 1], p['b_hh'][0, 1], True)
    o0 = jnp.concatenate([o0f, o0b], axis=-1)
    o1f = run_dir(o0, p['w_ih_l1'][0], p['w_hh'][1, 0], p['b_ih'][1, 0], p['b_hh'][1, 0], False)
    o1b = run_dir(o0, p['w_ih_l1'][1], p['w_hh'][1, 1], p['b_ih'][1, 1], p['b_hh'][1, 1], True)
    x4 = jnp.mean(jnp.concatenate([o1f, o1b], axis=-1), axis=1)   # (B, 2H)

    def conv_branch(w, b):
        k = w.shape[0]
        L = S - k + 1
        cols = [jnp.sum(emb[:, i:i + k, :] * w[None, :, :], axis=(1, 2)) + b for i in range(L)]
        c = jnp.maximum(jnp.stack(cols, axis=1), 0.0)
        return jnp.max(c, axis=1)                                  # (B,)

    c1 = conv_branch(p['conv1_w'], p['conv1_b'])
    c2 = conv_branch(p['conv2_w'], p['conv2_b'])
    c3 = conv_branch(p['conv3_w'], p['conv3_b'])
    feat = jnp.concatenate([c1[:, None], c2[:, None], c3[:, None], x4], axis=-1)
    logits = feat @ p['cls_w'].T + p['cls_b']
    return jax.nn.softmax(logits, axis=-1)


# -----------------------------------------------------------------------------
# Deterministic synthetic parameters (shapes follow my_model.__init__).
# -----------------------------------------------------------------------------
def init_params(key, vocab_size, vector_dim, sentence_length, hidden_size):
    D, H = vector_dim, hidden_size
    ks = jax.random.split(key, 14)

    def u(k, shape, scale):
        return jax.random.uniform(k, shape, jnp.float32, -scale, scale)

    s = 1.0 / float(H) ** 0.5
    return {
        'emb':     jax.random.normal(ks[0], (vocab_size, D), jnp.float32) * 0.5,
        'w_ih_l0': u(ks[1], (2, H, D), s),          # [dir, H, D]
        'w_ih_l1': u(ks[2], (2, H, 2 * H), s),      # [dir, H, 2H]
        'w_hh':    u(ks[3], (2, 2, H, H), s),       # [layer, dir, H, H]
        'b_ih':    u(ks[4], (2, 2, H), s),
        'b_hh':    u(ks[5], (2, 2, H), s),
        'conv1_w': u(ks[6], (3, D), 0.1), 'conv1_b': u(ks[7], (), 0.1),
        'conv2_w': u(ks[8], (4, D), 0.1), 'conv2_b': u(ks[9], (), 0.1),
        'conv3_w': u(ks[10], (5, D), 0.1), 'conv3_b': u(ks[11], (), 0.1),
        'cls_w':   u(ks[12], (3, 2 * H + 3), 0.3),  # Linear(vector_dim + 3, 3), D == 2H
        'cls_b':   u(ks[13], (3,), 0.3),
    }


if __name__ == "__main__":
    # Small shapes consistent with the module: vector_dim = 2 * hidden_size so the
    # Linear(vector_dim + 3, 3) input dimension matches the concatenated features.
    B, S, D, H, V = 2, 8, 32, 16, 30

    key = jax.random.PRNGKey(0)
    k_tok, k_par = jax.random.split(key)
    tokens = jax.random.randint(k_tok, (B, S), 0, V, dtype=jnp.int32)
    params = init_params(k_par, V, D, S, H)

    # Call-invariant packing is done ONCE (outside the per-call forward path).
    packed = pack_params(params, S, B)

    y = my_model_forward(tokens, packed)
    y = jax.block_until_ready(y)

    y_ref = jax.block_until_ready(reference_forward(tokens, params))
    np.testing.assert_allclose(np.asarray(y), np.asarray(y_ref), atol=5e-4, rtol=5e-4)

    print("KERNEL_OK")
</pallas_src>

<mosaic_0001>
module attributes {stable_mosaic.version = 11 : i64} {
  func.func @_model_kernel(%arg0: memref<20x32xf32, #tpu.memory_space<vmem>>, %arg1: memref<32x32xf32, #tpu.memory_space<vmem>>, %arg2: memref<32x32xf32, #tpu.memory_space<vmem>>, %arg3: memref<32x32xf32, #tpu.memory_space<vmem>>, %arg4: memref<32x32xf32, #tpu.memory_space<vmem>>, %arg5: memref<1x32xf32, #tpu.memory_space<vmem>>, %arg6: memref<1x32xf32, #tpu.memory_space<vmem>>, %arg7: memref<32x15xf32, #tpu.memory_space<vmem>>, %arg8: memref<1x3xf32, #tpu.memory_space<vmem>>, %arg9: memref<12x3xf32, #tpu.memory_space<vmem>>, %arg10: memref<35x3xf32, #tpu.memory_space<vmem>>, %arg11: memref<1x3xf32, #tpu.memory_space<vmem>>, %arg12: memref<2x3xf32, #tpu.memory_space<vmem>>, %arg13: memref<16x32xf32, #tpu.memory_space<vmem>>, %arg14: memref<16x32xf32, #tpu.memory_space<vmem>>) attributes {dimension_semantics = [], scalar_prefetch = 0 : i64, scratch_operands = 2 : i64, tpu.core_type = #tpu.core_type<tc>} {
    %c0 = arith.constant 0 : index
    %c0_0 = arith.constant 0 : index
    %0 = vector.load %arg0[%c0, %c0_0] : memref<20x32xf32, #tpu.memory_space<vmem>>, vector<16x32xf32>
    %c0_1 = arith.constant 0 : index
    %c0_2 = arith.constant 0 : index
    %1 = vector.load %arg1[%c0_1, %c0_2] : memref<32x32xf32, #tpu.memory_space<vmem>>, vector<32x32xf32>
    %cst = arith.constant dense<0.000000e+00> : vector<16x32xf32>
    %2 = tpu.matmul %0, %1, %cst {dimension_numbers = #tpu.dot_dimension_numbers<[1], [0], [0], [1], [0, 0, 1, 1], [], []>} : vector<16x32xf32>, vector<32x32xf32>, vector<16x32xf32> -> vector<16x32xf32>
    %c0_3 = arith.constant 0 : index
    %c0_4 = arith.constant 0 : index
    %3 = vector.load %arg5[%c0_3, %c0_4] : memref<1x32xf32, #tpu.memory_space<vmem>>, vector<1x32xf32>
    %4 = vector.broadcast %3 : vector<1x32xf32> to vector<16x32xf32>
    %5 = arith.addf %2, %4 : vector<16x32xf32>
    %6 = vector.extract_strided_slice %5 {offsets = [0, 0], sizes = [16, 16], strides = [1, 1]} : vector<16x32xf32> to vector<16x16xf32>
    %c0_5 = arith.constant 0 : index
    %c0_6 = arith.constant 0 : index
    %7 = vector.load %arg13[%c0_5, %c0_6] : memref<16x32xf32, #tpu.memory_space<vmem>>, vector<16x16xf32>
    tpu.vector_store %arg13[%c0_5, %c0_6], %6 {strides = array<i32>} : memref<16x32xf32, #tpu.memory_space<vmem>>, vector<16x16xf32>,
    %8 = vector.extract_strided_slice %5 {offsets = [14, 16], sizes = [2, 16], strides = [1, 1]} : vector<16x32xf32> to vector<2x16xf32>
    %c0_7 = arith.constant 0 : index
    %c16 = arith.constant 16 : index
    %9 = vector.load %arg13[%c0_7, %c16] : memref<16x32xf32, #tpu.memory_space<vmem>>, vector<2x16xf32>
    tpu.vector_store %arg13[%c0_7, %c16], %8 {strides = array<i32>} : memref<16x32xf32, #tpu.memory_space<vmem>>, vector<2x16xf32>,
    %10 = vector.extract_strided_slice %5 {offsets = [12, 16], sizes = [2, 16], strides = [1, 1]} : vector<16x32xf32> to vector<2x16xf32>
    %c2 = arith.constant 2 : index
    %c16_8 = arith.constant 16 : index
    %11 = vector.load %arg13[%c2, %c16_8] : memref<16x32xf32, #tpu.memory_space<vmem>>, vector<2x16xf32>
    tpu.vector_store %arg13[%c2, %c16_8], %10 {strides = array<i32>} : memref<16x32xf32, #tpu.memory_space<vmem>>, vector<2x16xf32>,
    %12 = vector.extract_strided_slice %5 {offsets = [10, 16], sizes = [2, 16], strides = [1, 1]} : vector<16x32xf32> to vector<2x16xf32>
    %c4 = arith.constant 4 : index
    %c16_9 = arith.constant 16 : index
    %13 = vector.load %arg13[%c4, %c16_9] : memref<16x32xf32, #tpu.memory_space<vmem>>, vector<2x16xf32>
    tpu.vector_store %arg13[%c4, %c16_9], %12 {strides = array<i32>} : memref<16x32xf32, #tpu.memory_space<vmem>>, vector<2x16xf32>,
    %14 = vector.extract_strided_slice %5 {offsets = [8, 16], sizes = [2, 16], strides = [1, 1]} : vector<16x32xf32> to vector<2x16xf32>
    %c6 = arith.constant 6 : index
    %c16_10 = arith.constant 16 : index
    %15 = vector.load %arg13[%c6, %c16_10] : memref<16x32xf32, #tpu.memory_space<vmem>>, vector<2x16xf32>
    tpu.vector_store %arg13[%c6, %c16_10], %14 {strides = array<i32>} : memref<16x32xf32, #tpu.memory_space<vmem>>, vector<2x16xf32>,
    %16 = vector.extract_strided_slice %5 {offsets = [6, 16], sizes = [2, 16], strides = [1, 1]} : vector<16x32xf32> to vector<2x16xf32>
    %c8 = arith.constant 8 : index
    %c16_11 = arith.constant 16 : index
    %17 = vector.load %arg13[%c8, %c16_11] : memref<16x32xf32, #tpu.memory_space<vmem>>, vector<2x16xf32>
    tpu.vector_store %arg13[%c8, %c16_11], %16 {strides = array<i32>} : memref<16x32xf32, #tpu.memory_space<vmem>>, vector<2x16xf32>,
    %18 = vector.extract_strided_slice %5 {offsets = [4, 16], sizes = [2, 16], strides = [1, 1]} : vector<16x32xf32> to vector<2x16xf32>
    %c10 = arith.constant 10 : index
    %c16_12 = arith.constant 16 : index
    %19 = vector.load %arg13[%c10, %c16_12] : memref<16x32xf32, #tpu.memory_space<vmem>>, vector<2x16xf32>
    tpu.vector_store %arg13[%c10, %c16_12], %18 {strides = array<i32>} : memref<16x32xf32, #tpu.memory_space<vmem>>, vector<2x16xf32>,
    %20 = vector.extract_strided_slice %5 {offsets = [2, 16], sizes = [2, 16], strides = [1, 1]} : vector<16x32xf32> to vector<2x16xf32>
    %c12 = arith.constant 12 : index
    %c16_13 = arith.constant 16 : index
    %21 = vector.load %arg13[%c12, %c16_13] : memref<16x32xf32, #tpu.memory_space<vmem>>, vector<2x16xf32>
    tpu.vector_store %arg13[%c12, %c16_13], %20 {strides = array<i32>} : memref<16x32xf32, #tpu.memory_space<vmem>>, vector<2x16xf32>,
    %22 = vector.extract_strided_slice %5 {offsets = [0, 16], sizes = [2, 16], strides = [1, 1]} : vector<16x32xf32> to vector<2x16xf32>
    %c14 = arith.constant 14 : index
    %c16_14 = arith.constant 16 : index
    %23 = vector.load %arg13[%c14, %c16_14] : memref<16x32xf32, #tpu.memory_space<vmem>>, vector<2x16xf32>
    tpu.vector_store %arg13[%c14, %c16_14], %22 {strides = array<i32>} : memref<16x32xf32, #tpu.memory_space<vmem>>, vector<2x16xf32>,
    %c0_15 = arith.constant 0 : index
    %c0_16 = arith.constant 0 : index
    %24 = vector.load %arg3[%c0_15, %c0_16] : memref<32x32xf32, #tpu.memory_space<vmem>>, vector<32x32xf32>
    %cst_17 = arith.constant 0.000000e+00 : f32
    %25 = vector.broadcast %cst_17 : f32 to vector<2x32xf32>
    %c0_18 = arith.constant 0 : index
    %c0_19 = arith.constant 0 : index
    %26 = vector.load %arg13[%c0_18, %c0_19] : memref<16x32xf32, #tpu.memory_space<vmem>>, vector<2x32xf32>
    %cst_20 = arith.constant dense<0.000000e+00> : vector<2x32xf32>
    %27 = tpu.matmul %25, %24, %cst_20 {dimension_numbers = #tpu.dot_dimension_numbers<[1], [0], [0], [1], [0, 0, 1, 1], [], []>} : vector<2x32xf32>, vector<32x32xf32>, vector<2x32xf32> -> vector<2x32xf32>
    %28 = arith.addf %26, %27 : vector<2x32xf32>
    %29 = math.tanh %28 : vector<2x32xf32>
    %30 = vector.extract_strided_slice %29 {offsets = [0, 0], sizes = [2, 16], strides = [1, 1]} : vector<2x32xf32> to vector<2x16xf32>
    %c0_21 = arith.constant 0 : index
    %c0_22 = arith.constant 0 : index
    %31 = vector.load %arg14[%c0_21, %c0_22] : memref<16x32xf32, #tpu.memory_space<vmem>>, vector<2x16xf32>
    tpu.vector_store %arg14[%c0_21, %c0_22], %30 {strides = array<i32>} : memref<16x32xf32, #tpu.memory_space<vmem>>, vector<2x16xf32>,
    %32 = vector.extract_strided_slice %29 {offsets = [0, 16], sizes = [2, 16], strides = [1, 1]} : vector<2x32xf32> to vector<2x16xf32>
    %c14_23 = arith.constant 14 : index
    %c16_24 = arith.constant 16 : index
    %33 = vector.load %arg14[%c14_23, %c16_24] : memref<16x32xf32, #tpu.memory_space<vmem>>, vector<2x16xf32>
    tpu.vector_store %arg14[%c14_23, %c16_24], %32 {strides = array<i32>} : memref<16x32xf32, #tpu.memory_space<vmem>>, vector<2x16xf32>,
    %c2_25 = arith.constant 2 : index
    %c0_26 = arith.constant 0 : index
    %34 = vector.load %arg13[%c2_25, %c0_26] : memref<16x32xf32, #tpu.memory_space<vmem>>, vector<2x32xf32>
    %cst_27 = arith.constant dense<0.000000e+00> : vector<2x32xf32>
    %35 = tpu.matmul %29, %24, %cst_27 {dimension_numbers = #tpu.dot_dimension_numbers<[1], [0], [0], [1], [0, 0, 1, 1], [], []>} : vector<2x32xf32>, vector<32x32xf32>, vector<2x32xf32> -> vector<2x32xf32>
    %36 = arith.addf %34, %35 : vector<2x32xf32>
    %37 = math.tanh %36 : vector<2x32xf32>
    %38 = vector.extract_strided_slice %37 {offsets = [0, 0], sizes = [2, 16], strides = [1, 1]} : vector<2x32xf32> to vector<2x16xf32>
    %c2_28 = arith.constant 2 : index
    %c0_29 = arith.constant 0 : index
    %39 = vector.load %arg14[%c2_28, %c0_29] : memref<16x32xf32, #tpu.memory_space<vmem>>, vector<2x16xf32>
    tpu.vector_store %arg14[%c2_28, %c0_29], %38 {strides = array<i32>} : memref<16x32xf32, #tpu.memory_space<vmem>>, vector<2x16xf32>,
    %40 = vector.extract_strided_slice %37 {offsets = [0, 16], sizes = [2, 16], strides = [1, 1]} : vector<2x32xf32> to vector<2x16xf32>
    %c12_30 = arith.constant 12 : index
    %c16_31 = arith.constant 16 : index
    %41 = vector.load %arg14[%c12_30, %c16_31] : memref<16x32xf32, #tpu.memory_space<vmem>>, vector<2x16xf32>
    tpu.vector_store %arg14[%c12_30, %c16_31], %40 {strides = array<i32>} : memref<16x32xf32, #tpu.memory_space<vmem>>, vector<2x16xf32>,
    %c4_32 = arith.constant 4 : index
    %c0_33 = arith.constant 0 : index
    %42 = vector.load %arg13[%c4_32, %c0_33] : memref<16x32xf32, #tpu.memory_space<vmem>>, vector<2x32xf32>
    %cst_34 = arith.constant dense<0.000000e+00> : vector<2x32xf32>
    %43 = tpu.matmul %37, %24, %cst_34 {dimension_numbers = #tpu.dot_dimension_numbers<[1], [0], [0], [1], [0, 0, 1, 1], [], []>} : vector<2x32xf32>, vector<32x32xf32>, vector<2x32xf32> -> vector<2x32xf32>
    %44 = arith.addf %42, %43 : vector<2x32xf32>
    %45 = math.tanh %44 : vector<2x32xf32>
    %46 = vector.extract_strided_slice %45 {offsets = [0, 0], sizes = [2, 16], strides = [1, 1]} : vector<2x32xf32> to vector<2x16xf32>
    %c4_35 = arith.constant 4 : index
    %c0_36 = arith.constant 0 : index
    %47 = vector.load %arg14[%c4_35, %c0_36] : memref<16x32xf32, #tpu.memory_space<vmem>>, vector<2x16xf32>
    tpu.vector_store %arg14[%c4_35, %c0_36], %46 {strides = array<i32>} : memref<16x32xf32, #tpu.memory_space<vmem>>, vector<2x16xf32>,
    %48 = vector.extract_strided_slice %45 {offsets = [0, 16], sizes = [2, 16], strides = [1, 1]} : vector<2x32xf32> to vector<2x16xf32>
    %c10_37 = arith.constant 10 : index
    %c16_38 = arith.constant 16 : index
    %49 = vector.load %arg14[%c10_37, %c16_38] : memref<16x32xf32, #tpu.memory_space<vmem>>, vector<2x16xf32>
    tpu.vector_store %arg14[%c10_37, %c16_38], %48 {strides = array<i32>} : memref<16x32xf32, #tpu.memory_space<vmem>>, vector<2x16xf32>,
    %c6_39 = arith.constant 6 : index
    %c0_40 = arith.constant 0 : index
    %50 = vector.load %arg13[%c6_39, %c0_40] : memref<16x32xf32, #tpu.memory_space<vmem>>, vector<2x32xf32>
    %cst_41 = arith.constant dense<0.000000e+00> : vector<2x32xf32>
    %51 = tpu.matmul %45, %24, %cst_41 {dimension_numbers = #tpu.dot_dimension_numbers<[1], [0], [0], [1], [0, 0, 1, 1], [], []>} : vector<2x32xf32>, vector<32x32xf32>, vector<2x32xf32> -> vector<2x32xf32>
    %52 = arith.addf %50, %51 : vector<2x32xf32>
    %53 = math.tanh %52 : vector<2x32xf32>
    %54 = vector.extract_strided_slice %53 {offsets = [0, 0], sizes = [2, 16], strides = [1, 1]} : vector<2x32xf32> to vector<2x16xf32>
    %c6_42 = arith.constant 6 : index
    %c0_43 = arith.constant 0 : index
    %55 = vector.load %arg14[%c6_42, %c0_43] : memref<16x32xf32, #tpu.memory_space<vmem>>, vector<2x16xf32>
    tpu.vector_store %arg14[%c6_42, %c0_43], %54 {strides = array<i32>} : memref<16x32xf32, #tpu.memory_space<vmem>>, vector<2x16xf32>,
    %56 = vector.extract_strided_slice %53 {offsets = [0, 16], sizes = [2, 16], strides = [1, 1]} : vector<2x32xf32> to vector<2x16xf32>
    %c8_44 = arith.constant 8 : index
    %c16_45 = arith.constant 16 : index
    %57 = vector.load %arg14[%c8_44, %c16_45] : memref<16x32xf32, #tpu.memory_space<vmem>>, vector<2x16xf32>
    tpu.vector_store %arg14[%c8_44, %c16_45], %56 {strides = array<i32>} : memref<16x32xf32, #tpu.memory_space<vmem>>, vector<2x16xf32>,
    %c8_46 = arith.constant 8 : index
    %c0_47 = arith.constant 0 : index
    %58 = vector.load %arg13[%c8_46, %c0_47] : memref<16x32xf32, #tpu.memory_space<vmem>>, vector<2x32xf32>
    %cst_48 = arith.constant dense<0.000000e+00> : vector<2x32xf32>
    %59 = tpu.matmul %53, %24, %cst_48 {dimension_numbers = #tpu.dot_dimension_numbers<[1], [0], [0], [1], [0, 0, 1, 1], [], []>} : vector<2x32xf32>, vector<32x32xf32>, vector<2x32xf32> -> vector<2x32xf32>
    %60 = arith.addf %58, %59 : vector<2x32xf32>
    %61 = math.tanh %60 : vector<2x32xf32>
    %62 = vector.extract_strided_slice %61 {offsets = [0, 0], sizes = [2, 16], strides = [1, 1]} : vector<2x32xf32> to vector<2x16xf32>
    %c8_49 = arith.constant 8 : index
    %c0_50 = arith.constant 0 : index
    %63 = vector.load %arg14[%c8_49, %c0_50] : memref<16x32xf32, #tpu.memory_space<vmem>>, vector<2x16xf32>
    tpu.vector_store %arg14[%c8_49, %c0_50], %62 {strides = array<i32>} : memref<16x32xf32, #tpu.memory_space<vmem>>, vector<2x16xf32>,
    %64 = vector.extract_strided_slice %61 {offsets = [0, 16], sizes = [2, 16], strides = [1, 1]} : vector<2x32xf32> to vector<2x16xf32>
    %c6_51 = arith.constant 6 : index
    %c16_52 = arith.constant 16 : index
    %65 = vector.load %arg14[%c6_51, %c16_52] : memref<16x32xf32, #tpu.memory_space<vmem>>, vector<2x16xf32>
    tpu.vector_store %arg14[%c6_51, %c16_52], %64 {strides = array<i32>} : memref<16x32xf32, #tpu.memory_space<vmem>>, vector<2x16xf32>,
    %c10_53 = arith.constant 10 : index
    %c0_54 = arith.constant 0 : index
    %66 = vector.load %arg13[%c10_53, %c0_54] : memref<16x32xf32, #tpu.memory_space<vmem>>, vector<2x32xf32>
    %cst_55 = arith.constant dense<0.000000e+00> : vector<2x32xf32>
    %67 = tpu.matmul %61, %24, %cst_55 {dimension_numbers = #tpu.dot_dimension_numbers<[1], [0], [0], [1], [0, 0, 1, 1], [], []>} : vector<2x32xf32>, vector<32x32xf32>, vector<2x32xf32> -> vector<2x32xf32>
    %68 = arith.addf %66, %67 : vector<2x32xf32>
    %69 = math.tanh %68 : vector<2x32xf32>
    %70 = vector.extract_strided_slice %69 {offsets = [0, 0], sizes = [2, 16], strides = [1, 1]} : vector<2x32xf32> to vector<2x16xf32>
    %c10_56 = arith.constant 10 : index
    %c0_57 = arith.constant 0 : index
    %71 = vector.load %arg14[%c10_56, %c0_57] : memref<16x32xf32, #tpu.memory_space<vmem>>, vector<2x16xf32>
    tpu.vector_store %arg14[%c10_56, %c0_57], %70 {strides = array<i32>} : memref<16x32xf32, #tpu.memory_space<vmem>>, vector<2x16xf32>,
    %72 = vector.extract_strided_slice %69 {offsets = [0, 16], sizes = [2, 16], strides = [1, 1]} : vector<2x32xf32> to vector<2x16xf32>
    %c4_58 = arith.constant 4 : index
    %c16_59 = arith.constant 16 : index
    %73 = vector.load %arg14[%c4_58, %c16_59] : memref<16x32xf32, #tpu.memory_space<vmem>>, vector<2x16xf32>
    tpu.vector_store %arg14[%c4_58, %c16_59], %72 {strides = array<i32>} : memref<16x32xf32, #tpu.memory_space<vmem>>, vector<2x16xf32>,
    %c12_60 = arith.constant 12 : index
    %c0_61 = arith.constant 0 : index
    %74 = vector.load %arg13[%c12_60, %c0_61] : memref<16x32xf32, #tpu.memory_space<vmem>>, vector<2x32xf32>
    %cst_62 = arith.constant dense<0.000000e+00> : vector<2x32xf32>
    %75 = tpu.matmul %69, %24, %cst_62 {dimension_numbers = #tpu.dot_dimension_numbers<[1], [0], [0], [1], [0, 0, 1, 1], [], []>} : vector<2x32xf32>, vector<32x32xf32>, vector<2x32xf32> -> vector<2x32xf32>
    %76 = arith.addf %74, %75 : vector<2x32xf32>
    %77 = math.tanh %76 : vector<2x32xf32>
    %78 = vector.extract_strided_slice %77 {offsets = [0, 0], sizes = [2, 16], strides = [1, 1]} : vector<2x32xf32> to vector<2x16xf32>
    %c12_63 = arith.constant 12 : index
    %c0_64 = arith.constant 0 : index
    %79 = vector.load %arg14[%c12_63, %c0_64] : memref<16x32xf32, #tpu.memory_space<vmem>>, vector<2x16xf32>
    tpu.vector_store %arg14[%c12_63, %c0_64], %78 {strides = array<i32>} : memref<16x32xf32, #tpu.memory_space<vmem>>, vector<2x16xf32>,
    %80 = vector.extract_strided_slice %77 {offsets = [0, 16], sizes = [2, 16], strides = [1, 1]} : vector<2x32xf32> to vector<2x16xf32>
    %c2_65 = arith.constant 2 : index
    %c16_66 = arith.constant 16 : index
    %81 = vector.load %arg14[%c2_65, %c16_66] : memref<16x32xf32, #tpu.memory_space<vmem>>, vector<2x16xf32>
    tpu.vector_store %arg14[%c2_65, %c16_66], %80 {strides = array<i32>} : memref<16x32xf32, #tpu.memory_space<vmem>>, vector<2x16xf32>,
    %c14_67 = arith.constant 14 : index
    %c0_68 = arith.constant 0 : index
    %82 = vector.load %arg13[%c14_67, %c0_68] : memref<16x32xf32, #tpu.memory_space<vmem>>, vector<2x32xf32>
    %cst_69 = arith.constant dense<0.000000e+00> : vector<2x32xf32>
    %83 = tpu.matmul %77, %24, %cst_69 {dimension_numbers = #tpu.dot_dimension_numbers<[1], [0], [0], [1], [0, 0, 1, 1], [], []>} : vector<2x32xf32>, vector<32x32xf32>, vector<2x32xf32> -> vector<2x32xf32>
    %84 = arith.addf %82, %83 : vector<2x32xf32>
    %85 = math.tanh %84 : vector<2x32xf32>
    %86 = vector.extract_strided_slice %85 {offsets = [0, 0], sizes = [2, 16], strides = [1, 1]} : vector<2x32xf32> to vector<2x16xf32>
    %c14_70 = arith.constant 14 : index
    %c0_71 = arith.constant 0 : index
    %87 = vector.load %arg14[%c14_70, %c0_71] : memref<16x32xf32, #tpu.memory_space<vmem>>, vector<2x16xf32>
    tpu.vector_store %arg14[%c14_70, %c0_71], %86 {strides = array<i32>} : memref<16x32xf32, #tpu.memory_space<vmem>>, vector<2x16xf32>,
    %88 = vector.extract_strided_slice %85 {offsets = [0, 16], sizes = [2, 16], strides = [1, 1]} : vector<2x32xf32> to vector<2x16xf32>
    %c0_72 = arith.constant 0 : index
    %c16_73 = arith.constant 16 : index
    %89 = vector.load %arg14[%c0_72, %c16_73] : memref<16x32xf32, #tpu.memory_space<vmem>>, vector<2x16xf32>
    tpu.vector_store %arg14[%c0_72, %c16_73], %88 {strides = array<i32>} : memref<16x32xf32, #tpu.memory_space<vmem>>, vector<2x16xf32>,
    %c0_74 = arith.constant 0 : index
    %c0_75 = arith.constant 0 : index
    %90 = vector.load %arg14[%c0_74, %c0_75] : memref<16x32xf32, #tpu.memory_space<vmem>>, vector<16x32xf32>
    %c0_76 = arith.constant 0 : index
    %c0_77 = arith.constant 0 : index
    %91 = vector.load %arg2[%c0_76, %c0_77] : memref<32x32xf32, #tpu.memory_space<vmem>>, vector<32x32xf32>
    %cst_78 = arith.constant dense<0.000000e+00> : vector<16x32xf32>
    %92 = tpu.matmul %90, %91, %cst_78 {dimension_numbers = #tpu.dot_dimension_numbers<[1], [0], [0], [1], [0, 0, 1, 1], [], []>} : vector<16x32xf32>, vector<32x32xf32>, vector<16x32xf32> -> vector<16x32xf32>
    %c0_79 = arith.constant 0 : index
    %c0_80 = arith.constant 0 : index
    %93 = vector.load %arg6[%c0_79, %c0_80] : memref<1x32xf32, #tpu.memory_space<vmem>>, vector<1x32xf32>
    %94 = vector.broadcast %93 : vector<1x32xf32> to vector<16x32xf32>
    %95 = arith.addf %92, %94 : vector<16x32xf32>
    %96 = vector.extract_strided_slice %95 {offsets = [0, 0], sizes = [16, 16], strides = [1, 1]} : vector<16x32xf32> to vector<16x16xf32>
    %c0_81 = arith.constant 0 : index
    %c0_82 = arith.constant 0 : index
    %97 = vector.load %arg13[%c0_81, %c0_82] : memref<16x32xf32, #tpu.memory_space<vmem>>, vector<16x16xf32>
    tpu.vector_store %arg13[%c0_81, %c0_82], %96 {strides = array<i32>} : memref<16x32xf32, #tpu.memory_space<vmem>>, vector<16x16xf32>,
    %98 = vector.extract_strided_slice %95 {offsets = [14, 16], sizes = [2, 16], strides = [1, 1]} : vector<16x32xf32> to vector<2x16xf32>
    %c0_83 = arith.constant 0 : index
    %c16_84 = arith.constant 16 : index
    %99 = vector.load %arg13[%c0_83, %c16_84] : memref<16x32xf32, #tpu.memory_space<vmem>>, vector<2x16xf32>
    tpu.vector_store %arg13[%c0_83, %c16_84], %98 {strides = array<i32>} : memref<16x32xf32, #tpu.memory_space<vmem>>, vector<2x16xf32>,
    %100 = vector.extract_strided_slice %95 {offsets = [12, 16], sizes = [2, 16], strides = [1, 1]} : vector<16x32xf32> to vector<2x16xf32>
    %c2_85 = arith.constant 2 : index
    %c16_86 = arith.constant 16 : index
    %101 = vector.load %arg13[%c2_85, %c16_86] : memref<16x32xf32, #tpu.memory_space<vmem>>, vector<2x16xf32>
    tpu.vector_store %arg13[%c2_85, %c16_86], %100 {strides = array<i32>} : memref<16x32xf32, #tpu.memory_space<vmem>>, vector<2x16xf32>,
    %102 = vector.extract_strided_slice %95 {offsets = [10, 16], sizes = [2, 16], strides = [1, 1]} : vector<16x32xf32> to vector<2x16xf32>
    %c4_87 = arith.constant 4 : index
    %c16_88 = arith.constant 16 : index
    %103 = vector.load %arg13[%c4_87, %c16_88] : memref<16x32xf32, #tpu.memory_space<vmem>>, vector<2x16xf32>
    tpu.vector_store %arg13[%c4_87, %c16_88], %102 {strides = array<i32>} : memref<16x32xf32, #tpu.memory_space<vmem>>, vector<2x16xf32>,
    %104 = vector.extract_strided_slice %95 {offsets = [8, 16], sizes = [2, 16], strides = [1, 1]} : vector<16x32xf32> to vector<2x16xf32>
    %c6_89 = arith.constant 6 : index
    %c16_90 = arith.constant 16 : index
    %105 = vector.load %arg13[%c6_89, %c16_90] : memref<16x32xf32, #tpu.memory_space<vmem>>, vector<2x16xf32>
    tpu.vector_store %arg13[%c6_89, %c16_90], %104 {strides = array<i32>} : memref<16x32xf32, #tpu.memory_space<vmem>>, vector<2x16xf32>,
    %106 = vector.extract_strided_slice %95 {offsets = [6, 16], sizes = [2, 16], strides = [1, 1]} : vector<16x32xf32> to vector<2x16xf32>
    %c8_91 = arith.constant 8 : index
    %c16_92 = arith.constant 16 : index
    %107 = vector.load %arg13[%c8_91, %c16_92] : memref<16x32xf32, #tpu.memory_space<vmem>>, vector<2x16xf32>
    tpu.vector_store %arg13[%c8_91, %c16_92], %106 {strides = array<i32>} : memref<16x32xf32, #tpu.memory_space<vmem>>, vector<2x16xf32>,
    %108 = vector.extract_strided_slice %95 {offsets = [4, 16], sizes = [2, 16], strides = [1, 1]} : vector<16x32xf32> to vector<2x16xf32>
    %c10_93 = arith.constant 10 : index
    %c16_94 = arith.constant 16 : index
    %109 = vector.load %arg13[%c10_93, %c16_94] : memref<16x32xf32, #tpu.memory_space<vmem>>, vector<2x16xf32>
    tpu.vector_store %arg13[%c10_93, %c16_94], %108 {strides = array<i32>} : memref<16x32xf32, #tpu.memory_space<vmem>>, vector<2x16xf32>,
    %110 = vector.extract_strided_slice %95 {offsets = [2, 16], sizes = [2, 16], strides = [1, 1]} : vector<16x32xf32> to vector<2x16xf32>
    %c12_95 = arith.constant 12 : index
    %c16_96 = arith.constant 16 : index
    %111 = vector.load %arg13[%c12_95, %c16_96] : memref<16x32xf32, #tpu.memory_space<vmem>>, vector<2x16xf32>
    tpu.vector_store %arg13[%c12_95, %c16_96], %110 {strides = array<i32>} : memref<16x32xf32, #tpu.memory_space<vmem>>, vector<2x16xf32>,
    %112 = vector.extract_strided_slice %95 {offsets = [0, 16], sizes = [2, 16], strides = [1, 1]} : vector<16x32xf32> to vector<2x16xf32>
    %c14_97 = arith.constant 14 : index
    %c16_98 = arith.constant 16 : index
    %113 = vector.load %arg13[%c14_97, %c16_98] : memref<16x32xf32, #tpu.memory_space<vmem>>, vector<2x16xf32>
    tpu.vector_store %arg13[%c14_97, %c16_98], %112 {strides = array<i32>} : memref<16x32xf32, #tpu.memory_space<vmem>>, vector<2x16xf32>,
    %c0_99 = arith.constant 0 : index
    %c0_100 = arith.constant 0 : index
    %114 = vector.load %arg4[%c0_99, %c0_100] : memref<32x32xf32, #tpu.memory_space<vmem>>, vector<32x32xf32>
    %cst_101 = arith.constant 0.000000e+00 : f32
    %115 = vector.broadcast %cst_101 : f32 to vector<2x32xf32>
    %cst_102 = arith.constant 0.000000e+00 : f32
    %116 = vector.broadcast %cst_102 : f32 to vector<2x32xf32>
    %c0_103 = arith.constant 0 : index
    %c0_104 = arith.constant 0 : index
    %117 = vector.load %arg13[%c0_103, %c0_104] : memref<16x32xf32, #tpu.memory_space<vmem>>, vector<2x32xf32>
    %cst_105 = arith.constant dense<0.000000e+00> : vector<2x32xf32>
    %118 = tpu.matmul %115, %114, %cst_105 {dimension_numbers = #tpu.dot_dimension_numbers<[1], [0], [0], [1], [0, 0, 1, 1], [], []>} : vector<2x32xf32>, vector<32x32xf32>, vector<2x32xf32> -> vector<2x32xf32>
    %119 = arith.addf %117, %118 : vector<2x32xf32>
    %120 = math.tanh %119 : vector<2x32xf32>
    %121 = arith.addf %116, %120 : vector<2x32xf32>
    %c2_106 = arith.constant 2 : index
    %c0_107 = arith.constant 0 : index
    %122 = vector.load %arg13[%c2_106, %c0_107] : memref<16x32xf32, #tpu.memory_space<vmem>>, vector<2x32xf32>
    %cst_108 = arith.constant dense<0.000000e+00> : vector<2x32xf32>
    %123 = tpu.matmul %120, %114, %cst_108 {dimension_numbers = #tpu.dot_dimension_numbers<[1], [0], [0], [1], [0, 0, 1, 1], [], []>} : vector<2x32xf32>, vector<32x32xf32>, vector<2x32xf32> -> vector<2x32xf32>
    %124 = arith.addf %122, %123 : vector<2x32xf32>
    %125 = math.tanh %124 : vector<2x32xf32>
    %126 = arith.addf %121, %125 : vector<2x32xf32>
    %c4_109 = arith.constant 4 : index
    %c0_110 = arith.constant 0 : index
    %127 = vector.load %arg13[%c4_109, %c0_110] : memref<16x32xf32, #tpu.memory_space<vmem>>, vector<2x32xf32>
    %cst_111 = arith.constant dense<0.000000e+00> : vector<2x32xf32>
    %128 = tpu.matmul %125, %114, %cst_111 {dimension_numbers = #tpu.dot_dimension_numbers<[1], [0], [0], [1], [0, 0, 1, 1], [], []>} : vector<2x32xf32>, vector<32x32xf32>, vector<2x32xf32> -> vector<2x32xf32>
    %129 = arith.addf %127, %128 : vector<2x32xf32>
    %130 = math.tanh %129 : vector<2x32xf32>
    %131 = arith.addf %126, %130 : vector<2x32xf32>
    %c6_112 = arith.constant 6 : index
    %c0_113 = arith.constant 0 : index
    %132 = vector.load %arg13[%c6_112, %c0_113] : memref<16x32xf32, #tpu.memory_space<vmem>>, vector<2x32xf32>
    %cst_114 = arith.constant dense<0.000000e+00> : vector<2x32xf32>
    %133 = tpu.matmul %130, %114, %cst_114 {dimension_numbers = #tpu.dot_dimension_numbers<[1], [0], [0], [1], [0, 0, 1, 1], [], []>} : vector<2x32xf32>, vector<32x32xf32>, vector<2x32xf32> -> vector<2x32xf32>
    %134 = arith.addf %132, %133 : vector<2x32xf32>
    %135 = math.tanh %134 : vector<2x32xf32>
    %136 = arith.addf %131, %135 : vector<2x32xf32>
    %c8_115 = arith.constant 8 : index
    %c0_116 = arith.constant 0 : index
    %137 = vector.load %arg13[%c8_115, %c0_116] : memref<16x32xf32, #tpu.memory_space<vmem>>, vector<2x32xf32>
    %cst_117 = arith.constant dense<0.000000e+00> : vector<2x32xf32>
    %138 = tpu.matmul %135, %114, %cst_117 {dimension_numbers = #tpu.dot_dimension_numbers<[1], [0], [0], [1], [0, 0, 1, 1], [], []>} : vector<2x32xf32>, vector<32x32xf32>, vector<2x32xf32> -> vector<2x32xf32>
    %139 = arith.addf %137, %138 : vector<2x32xf32>
    %140 = math.tanh %139 : vector<2x32xf32>
    %141 = arith.addf %136, %140 : vector<2x32xf32>
    %c10_118 = arith.constant 10 : index
    %c0_119 = arith.constant 0 : index
    %142 = vector.load %arg13[%c10_118, %c0_119] : memref<16x32xf32, #tpu.memory_space<vmem>>, vector<2x32xf32>
    %cst_120 = arith.constant dense<0.000000e+00> : vector<2x32xf32>
    %143 = tpu.matmul %140, %114, %cst_120 {dimension_numbers = #tpu.dot_dimension_numbers<[1], [0], [0], [1], [0, 0, 1, 1], [], []>} : vector<2x32xf32>, vector<32x32xf32>, vector<2x32xf32> -> vector<2x32xf32>
    %144 = arith.addf %142, %143 : vector<2x32xf32>
    %145 = math.tanh %144 : vector<2x32xf32>
    %146 = arith.addf %141, %145 : vector<2x32xf32>
    %c12_121 = arith.constant 12 : index
    %c0_122 = arith.constant 0 : index
    %147 = vector.load %arg13[%c12_121, %c0_122] : memref<16x32xf32, #tpu.memory_space<vmem>>, vector<2x32xf32>
    %cst_123 = arith.constant dense<0.000000e+00> : vector<2x32xf32>
    %148 = tpu.matmul %145, %114, %cst_123 {dimension_numbers = #tpu.dot_dimension_numbers<[1], [0], [0], [1], [0, 0, 1, 1], [], []>} : vector<2x32xf32>, vector<32x32xf32>, vector<2x32xf32> -> vector<2x32xf32>
    %149 = arith.addf %147, %148 : vector<2x32xf32>
    %150 = math.tanh %149 : vector<2x32xf32>
    %151 = arith.addf %146, %150 : vector<2x32xf32>
    %c14_124 = arith.constant 14 : index
    %c0_125 = arith.constant 0 : index
    %152 = vector.load %arg13[%c14_124, %c0_125] : memref<16x32xf32, #tpu.memory_space<vmem>>, vector<2x32xf32>
    %cst_126 = arith.constant dense<0.000000e+00> : vector<2x32xf32>
    %153 = tpu.matmul %150, %114, %cst_126 {dimension_numbers = #tpu.dot_dimension_numbers<[1], [0], [0], [1], [0, 0, 1, 1], [], []>} : vector<2x32xf32>, vector<32x32xf32>, vector<2x32xf32> -> vector<2x32xf32>
    %154 = arith.addf %152, %153 : vector<2x32xf32>
    %155 = math.tanh %154 : vector<2x32xf32>
    %156 = arith.addf %151, %155 : vector<2x32xf32>
    %cst_127 = arith.constant 1.250000e-01 : f32
    %157 = vector.broadcast %cst_127 : f32 to vector<2x32xf32>
    %158 = arith.mulf %156, %157 : vector<2x32xf32>
    %c0_128 = arith.constant 0 : index
    %c0_129 = arith.constant 0 : index
    %159 = vector.load %arg0[%c0_128, %c0_129] : memref<20x32xf32, #tpu.memory_space<vmem>>, vector<20x32xf32>
    %c0_130 = arith.constant 0 : index
    %c0_131 = arith.constant 0 : index
    %160 = vector.load %arg7[%c0_130, %c0_131] : memref<32x15xf32, #tpu.memory_space<vmem>>, vector<32x15xf32>
    %cst_132 = arith.constant dense<0.000000e+00> : vector<20x15xf32>
    %161 = tpu.matmul %159, %160, %cst_132 {dimension_numbers = #tpu.dot_dimension_numbers<[1], [0], [0], [1], [0, 0, 1, 1], [], []>} : vector<20x32xf32>, vector<32x15xf32>, vector<20x15xf32> -> vector<20x15xf32>
    %162 = vector.extract_strided_slice %161 {offsets = [0, 0], sizes = [12, 3], strides = [1, 1]} : vector<20x15xf32> to vector<12x3xf32>
    %163 = vector.extract_strided_slice %161 {offsets = [2, 3], sizes = [12, 3], strides = [1, 1]} : vector<20x15xf32> to vector<12x3xf32>
    %164 = arith.addf %162, %163 : vector<12x3xf32>
    %165 = vector.extract_strided_slice %161 {offsets = [4, 6], sizes = [12, 3], strides = [1, 1]} : vector<20x15xf32> to vector<12x3xf32>
    %166 = arith.addf %164, %165 : vector<12x3xf32>
    %167 = vector.extract_strided_slice %161 {offsets = [6, 9], sizes = [12, 3], strides = [1, 1]} : vector<20x15xf32> to vector<12x3xf32>
    %168 = arith.addf %166, %167 : vector<12x3xf32>
    %169 = vector.extract_strided_slice %161 {offsets = [8, 12], sizes = [12, 3], strides = [1, 1]} : vector<20x15xf32> to vector<12x3xf32>
    %170 = arith.addf %168, %169 : vector<12x3xf32>
    %c0_133 = arith.constant 0 : index
    %c0_134 = arith.constant 0 : index
    %171 = vector.load %arg8[%c0_133, %c0_134] : memref<1x3xf32, #tpu.memory_space<vmem>>, vector<1x3xf32>
    %172 = vector.broadcast %171 : vector<1x3xf32> to vector<12x3xf32>
    %173 = arith.addf %170, %172 : vector<12x3xf32>
    %cst_135 = arith.constant 0.000000e+00 : f32
    %174 = vector.broadcast %cst_135 : f32 to vector<12x3xf32>
    %175 = arith.maximumf %173, %174 : vector<12x3xf32>
    %c0_136 = arith.constant 0 : index
    %c0_137 = arith.constant 0 : index
    %176 = vector.load %arg9[%c0_136, %c0_137] : memref<12x3xf32, #tpu.memory_space<vmem>>, vector<12x3xf32>
    %cst_138 = arith.constant 5.000000e-01 : f32
    %177 = vector.broadcast %cst_138 : f32 to vector<12x3xf32>
    %178 = arith.cmpf ogt, %176, %177 : vector<12x3xf32>
    %cst_139 = arith.constant 0xFF800000 : f32
    %179 = vector.broadcast %cst_139 : f32 to vector<12x3xf32>
    %180 = arith.select %178, %175, %179 : vector<12x3xi1>, vector<12x3xf32>
    %181 = vector.extract_strided_slice %180 {offsets = [0, 0], sizes = [2, 3], strides = [1, 1]} : vector<12x3xf32> to vector<2x3xf32>
    %182 = vector.extract_strided_slice %180 {offsets = [2, 0], sizes = [2, 3], strides = [1, 1]} : vector<12x3xf32> to vector<2x3xf32>
    %183 = arith.maximumf %181, %182 : vector<2x3xf32>
    %184 = vector.extract_strided_slice %180 {offsets = [4, 0], sizes = [2, 3], strides = [1, 1]} : vector<12x3xf32> to vector<2x3xf32>
    %185 = arith.maximumf %183, %184 : vector<2x3xf32>
    %186 = vector.extract_strided_slice %180 {offsets = [6, 0], sizes = [2, 3], strides = [1, 1]} : vector<12x3xf32> to vector<2x3xf32>
    %187 = arith.maximumf %185, %186 : vector<2x3xf32>
    %188 = vector.extract_strided_slice %180 {offsets = [8, 0], sizes = [2, 3], strides = [1, 1]} : vector<12x3xf32> to vector<2x3xf32>
    %189 = arith.maximumf %187, %188 : vector<2x3xf32>
    %190 = vector.extract_strided_slice %180 {offsets = [10, 0], sizes = [2, 3], strides = [1, 1]} : vector<12x3xf32> to vector<2x3xf32>
    %191 = arith.maximumf %189, %190 : vector<2x3xf32>
    %c0_140 = arith.constant 0 : index
    %c0_141 = arith.constant 0 : index
    %192 = vector.load %arg10[%c0_140, %c0_141] : memref<35x3xf32, #tpu.memory_space<vmem>>, vector<35x3xf32>
    %193 = vector.extract_strided_slice %191 {offsets = [0, 0], sizes = [2, 1], strides = [1, 1]} : vector<2x3xf32> to vector<2x1xf32>
    %194 = vector.extract_strided_slice %192 {offsets = [0, 0], sizes = [1, 3], strides = [1, 1]} : vector<35x3xf32> to vector<1x3xf32>
    %195 = vector.broadcast %193 : vector<2x1xf32> to vector<2x3xf32>
    %196 = vector.broadcast %194 : vector<1x3xf32> to vector<2x3xf32>
    %197 = arith.mulf %195, %196 : vector<2x3xf32>
    %198 = vector.extract_strided_slice %191 {offsets = [0, 1], sizes = [2, 1], strides = [1, 1]} : vector<2x3xf32> to vector<2x1xf32>
    %199 = vector.extract_strided_slice %192 {offsets = [1, 0], sizes = [1, 3], strides = [1, 1]} : vector<35x3xf32> to vector<1x3xf32>
    %200 = vector.broadcast %198 : vector<2x1xf32> to vector<2x3xf32>
    %201 = vector.broadcast %199 : vector<1x3xf32> to vector<2x3xf32>
    %202 = arith.mulf %200, %201 : vector<2x3xf32>
    %203 = arith.addf %197, %202 : vector<2x3xf32>
    %204 = vector.extract_strided_slice %191 {offsets = [0, 2], sizes = [2, 1], strides = [1, 1]} : vector<2x3xf32> to vector<2x1xf32>
    %205 = vector.extract_strided_slice %192 {offsets = [2, 0], sizes = [1, 3], strides = [1, 1]} : vector<35x3xf32> to vector<1x3xf32>
    %206 = vector.broadcast %204 : vector<2x1xf32> to vector<2x3xf32>
    %207 = vector.broadcast %205 : vector<1x3xf32> to vector<2x3xf32>
    %208 = arith.mulf %206, %207 : vector<2x3xf32>
    %209 = arith.addf %203, %208 : vector<2x3xf32>
    %210 = vector.extract_strided_slice %192 {offsets = [3, 0], sizes = [32, 3], strides = [1, 1]} : vector<35x3xf32> to vector<32x3xf32>
    %cst_142 = arith.constant dense<0.000000e+00> : vector<2x3xf32>
    %211 = tpu.matmul %158, %210, %cst_142 {dimension_numbers = #tpu.dot_dimension_numbers<[1], [0], [0], [1], [0, 0, 1, 1], [], []>} : vector<2x32xf32>, vector<32x3xf32>, vector<2x3xf32> -> vector<2x3xf32>
    %212 = arith.addf %209, %211 : vector<2x3xf32>
    %c0_143 = arith.constant 0 : index
    %c0_144 = arith.constant 0 : index
    %213 = vector.load %arg11[%c0_143, %c0_144] : memref<1x3xf32, #tpu.memory_space<vmem>>, vector<1x3xf32>
    %214 = vector.broadcast %213 : vector<1x3xf32> to vector<2x3xf32>
    %215 = arith.addf %212, %214 : vector<2x3xf32>
    %cst_145 = arith.constant dense<0xFF800000> : vector<2xf32>
    %216 = vector.multi_reduction <maximumf>, %215, %cst_145 [1] : vector<2x3xf32> to vector<2xf32>
    %217 = vector.shape_cast %216 : vector<2xf32> to vector<2x1xf32>
    %218 = vector.broadcast %217 : vector<2x1xf32> to vector<2x3xf32>
    %219 = arith.subf %215, %218 : vector<2x3xf32>
    %220 = math.exp %219 : vector<2x3xf32>
    %cst_146 = arith.constant dense<0.000000e+00> : vector<2xf32>
    %221 = vector.multi_reduction <add>, %220, %cst_146 [1] : vector<2x3xf32> to vector<2xf32>
    %222 = vector.shape_cast %221 : vector<2xf32> to vector<2x1xf32>
    %223 = vector.broadcast %222 : vector<2x1xf32> to vector<2x3xf32>
    %224 = arith.divf %220, %223 : vector<2x3xf32>
    %c0_147 = arith.constant 0 : index
    %c0_148 = arith.constant 0 : index
    %225 = vector.load %arg12[%c0_147, %c0_148] : memref<2x3xf32, #tpu.memory_space<vmem>>, vector<2x3xf32>
    tpu.vector_store %arg12[%c0_147, %c0_148], %224 {strides = array<i32>} : memref<2x3xf32, #tpu.memory_space<vmem>>, vector<2x3xf32>,
    return
  }
}

</mosaic_0001>

<llo_original>
// kernel: tpu_custom_call.1
$region0: #{tpu_custom_call.1}
  #allocation0 [shape = 'u32[]', space=smem, size = 0x4, offset = 0x4, fixed_abs, tag = 'smem constant byte address 0x4 - core index']
  #allocation1 [shape = 'u32[144,128]{1,0:T(1,128)}', space=vmem, size = 0x12000, scoped, tag = 'internal scratch']
  #allocation2 [shape = 'f32[16,32]{1,0:T(8,128)}', space=vmem, size = 0x2000, scoped, tag = 'scratch operand']
  #allocation3 [shape = 'f32[16,32]{1,0:T(8,128)}', space=vmem, size = 0x2000, scoped, tag = 'scratch operand']
  %s0 = inlined_call_operand.hbm [shape: f32[20,32], index: 0, kind: input, shape index: {}]
  %s1 = inlined_call_operand.vmem [shape: f32[32,32], index: 1, kind: input, shape index: {}]
  %s2 = inlined_call_operand.vmem [shape: f32[32,32], index: 2, kind: input, shape index: {}]
  %s3 = inlined_call_operand.vmem [shape: f32[32,32], index: 3, kind: input, shape index: {}]
  %s4 = inlined_call_operand.hbm [shape: f32[32,32], index: 4, kind: input, shape index: {}]
  %s5 = inlined_call_operand.vmem [shape: f32[1,32], index: 5, kind: input, shape index: {}]
  %s6 = inlined_call_operand.vmem [shape: f32[1,32], index: 6, kind: input, shape index: {}]
  %s7 = inlined_call_operand.vmem [shape: f32[32,15], index: 7, kind: input, shape index: {}]
  %s8 = inlined_call_operand.vmem [shape: f32[1,3], index: 8, kind: input, shape index: {}]
  %s9 = inlined_call_operand.vmem [shape: f32[12,3], index: 9, kind: input, shape index: {}]
  %s10 = inlined_call_operand.vmem [shape: f32[35,3], index: 10, kind: input, shape index: {}]
  %s11 = inlined_call_operand.vmem [shape: f32[1,3], index: 11, kind: input, shape index: {}]
  %s12 = inlined_call_operand.hbm [shape: f32[2,3], index: 12, kind: output, shape index: {}]
  %s13 = sld [smem:[#allocation0]]
  $region66: #{tpu_custom_call.1} parent=0
    _
  %s15 = ssub.s32 1, %s13
  %s16 = scalar_select 0, %s15, %s13
  $region1: #{tpu_custom_call.1} parent=0
    #allocation4 [shape = 'u8[12288]{0}', space=vmem, size = 0x3000, scoped, tag = 'input window, operand 0, single buffered']
    #allocation5 [shape = 's32[1]{0}', space=sflag, size = 0x4, scoped, tag = 'scoped memory for tpu_custom_call.1']
    #allocation6 [shape = 's32[1]{0}', space=sflag, size = 0x4, scoped, tag = 'scoped memory for tpu_custom_call.1']
    #allocation7 [shape = 'u8[16384]{0}', space=vmem, size = 0x4000, scoped, tag = 'input window, operand 4, single buffered']
    #allocation8 [shape = 's32[1]{0}', space=sflag, size = 0x4, scoped, tag = 'scoped memory for tpu_custom_call.1']
    #allocation9 [shape = 'u8[1024]{0}', space=vmem, size = 0x400, scoped, tag = 'output window, operand 0, single buffered']
    %17 = vsyncpa [#allocation5], 0
    %18 = vsyncpa [#allocation8], 0
    %19 = vsyncpa [#allocation6], 0
    // Predicated region
    $region2: #{tpu_custom_call.1} parent=1 // pred_check
      _
    $region3: #{tpu_custom_call.1} parent=1 // pred_check_branch
      %21 = sbr.rel (0) target = $region5
    $region4: #{tpu_custom_call.1} parent=1 // pred_region
      %s23 = ssub.s32 384, 384
      %24 = vsyncadd [#allocation5], %s23
      %s25 = sshll.u32 [#allocation4], 4
      %s26 = int_to_ptr.vmem [resolvable:$true] %s25
      %31 = dma.hbm_to_vmem [thread:$0]  %s0, 384, %s26, [#allocation5], 128, 128, 8
    $region5: #{tpu_custom_call.1} parent=1 // pred_fallthru
      _
    // Predicated region
    $region6: #{tpu_custom_call.1} parent=1 // pred_check
      _
    $region7: #{tpu_custom_call.1} parent=1 // pred_check_branch
      %33 = sbr.rel (0) target = $region9
    $region8: #{tpu_custom_call.1} parent=1 // pred_region
      _
    $region9: #{tpu_custom_call.1} parent=1 // pred_fallthru
      _
    // Predicated region
    $region10: #{tpu_custom_call.1} parent=1 // pred_check
      _
    $region11: #{tpu_custom_call.1} parent=1 // pred_check_branch
      %35 = sbr.rel (0) target = $region13
    $region12: #{tpu_custom_call.1} parent=1 // pred_region
      _
    $region13: #{tpu_custom_call.1} parent=1 // pred_fallthru
      _
    // Predicated region
    $region14: #{tpu_custom_call.1} parent=1 // pred_check
      _
    $region15: #{tpu_custom_call.1} parent=1 // pred_check_branch
      %37 = sbr.rel (0) target = $region17
    $region16: #{tpu_custom_call.1} parent=1 // pred_region
      _
    $region17: #{tpu_custom_call.1} parent=1 // pred_fallthru
      _
    // Predicated region
    $region18: #{tpu_custom_call.1} parent=1 // pred_check
      _
    $region19: #{tpu_custom_call.1} parent=1 // pred_check_branch
      %39 = sbr.rel (0) target = $region21
    $region20: #{tpu_custom_call.1} parent=1 // pred_region
      %s41 = ssub.s32 512, 512
      %42 = vsyncadd [#allocation8], %s41
      %s43 = sshll.u32 [#allocation7], 4
      %s44 = int_to_ptr.vmem [resolvable:$true] %s43
      %49 = dma.hbm_to_vmem [thread:$0]  %s4, 512, %s44, [#allocation8], 128, 128, 8
    $region21: #{tpu_custom_call.1} parent=1 // pred_fallthru
      _
    // Predicated region
    $region22: #{tpu_custom_call.1} parent=1 // pred_check
      _
    $region23: #{tpu_custom_call.1} parent=1 // pred_check_branch
      %51 = sbr.rel (0) target = $region25
    $region24: #{tpu_custom_call.1} parent=1 // pred_region
      _
    $region25: #{tpu_custom_call.1} parent=1 // pred_fallthru
      _
    // Predicated region
    $region26: #{tpu_custom_call.1} parent=1 // pred_check
      _
    $region27: #{tpu_custom_call.1} parent=1 // pred_check_branch
      %53 = sbr.rel (0) target = $region29
    $region28: #{tpu_custom_call.1} parent=1 // pred_region
      _
    $region29: #{tpu_custom_call.1} parent=1 // pred_fallthru
      _
    // Predicated region
    $region30: #{tpu_custom_call.1} parent=1 // pred_check
      _
    $region31: #{tpu_custom_call.1} parent=1 // pred_check_branch
      %55 = sbr.rel (0) target = $region33
    $region32: #{tpu_custom_call.1} parent=1 // pred_region
      _
    $region33: #{tpu_custom_call.1} parent=1 // pred_fallthru
      _
    // Predicated region
    $region34: #{tpu_custom_call.1} parent=1 // pred_check
      _
    $region35: #{tpu_custom_call.1} parent=1 // pred_check_branch
      %57 = sbr.rel (0) target = $region37
    $region36: #{tpu_custom_call.1} parent=1 // pred_region
      _
    $region37: #{tpu_custom_call.1} parent=1 // pred_fallthru
      _
    // Predicated region
    $region38: #{tpu_custom_call.1} parent=1 // pred_check
      _
    $region39: #{tpu_custom_call.1} parent=1 // pred_check_branch
      %59 = sbr.rel (0) target = $region41
    $region40: #{tpu_custom_call.1} parent=1 // pred_region
      _
    $region41: #{tpu_custom_call.1} parent=1 // pred_fallthru
      _
    // Predicated region
    $region42: #{tpu_custom_call.1} parent=1 // pred_check
      _
    $region43: #{tpu_custom_call.1} parent=1 // pred_check_branch
      %61 = sbr.rel (0) target = $region45
    $region44: #{tpu_custom_call.1} parent=1 // pred_region
      _
    $region45: #{tpu_custom_call.1} parent=1 // pred_fallthru
      _
    // Predicated region
    $region46: #{tpu_custom_call.1} parent=1 // pred_check
      _
    $region47: #{tpu_custom_call.1} parent=1 // pred_check_branch
      %63 = sbr.rel (0) target = $region49
    $region48: #{tpu_custom_call.1} parent=1 // pred_region
      _
    $region49: #{tpu_custom_call.1} parent=1 // pred_fallthru
      _
    // Predicated region
    $region50: #{tpu_custom_call.1} parent=1 // pred_check
      _
    $region51: #{tpu_custom_call.1} parent=1 // pred_check_branch
      %65 = sbr.rel (0) target = $region53
    $region52: #{tpu_custom_call.1} parent=1 // pred_region
      %66 = dma.done [#allocation5], 384
    $region53: #{tpu_custom_call.1} parent=1 // pred_fallthru
      _
    // Predicated region
    $region54: #{tpu_custom_call.1} parent=1 // pred_check
      _
    $region55: #{tpu_custom_call.1} parent=1 // pred_check_branch
      %68 = sbr.rel (0) target = $region57
    $region56: #{tpu_custom_call.1} parent=1 // pred_region
      %69 = dma.done [#allocation8], 512
    $region57: #{tpu_custom_call.1} parent=1 // pred_fallthru
      _
    %v70 = vld [vmem:[#allocation4] sm:$0xff]
    %v71 = vld [vmem:[#allocation4 + $0x8] sm:$0xff]
    %v72 = vld [vmem:[%s1] sm:$0xff]
    %v73 = vld [vmem:[%s1 + $0x8] sm:$0xff]
    %v74 = vld [vmem:[%s1 + $0x10] sm:$0xff]
    %v75 = vld [vmem:[%s1 + $0x18] sm:$0xff]
    %v76 = vld [vmem:[%s5] sm:$0x1]
    %v78 = vlaneseq
    %v79 = vshrl.u32 %v78, 7
    %v80 = vsub.s32 0, %v79
    %v81 = vrot.slane %v76, %v80
    %vm83 = vcmask 261120
    %v85 = vsel %vm83, %v70, 0
    %v88 = vsel %vm83, %v71, 0
    %90 = vmatprep.subr.mxu0 0.0
    %91 = vmatpush1.msra.mxu0 0.0
    %92 = vmatprep.subr.mxu0 0.0
    %93 = vmatpush1.msra.mxu0 0.0
    %94 = vmatprep.subr.mxu0 0.0
    %95 = vmatpush1.msra.mxu0 0.0
    %96 = vmatprep.subr.mxu0 0.0
    %97 = vmatpush1.msra.mxu0 0.0
    %98 = vmatprep.subr.mxu0 0.0
    %99 = vmatpush1.msra.mxu0 0.0
    %100 = vmatprep.subr.mxu0 0.0
    %101 = vmatpush1.msra.mxu0 0.0
    %102 = vmatprep.subr.mxu0 0.0
    %103 = vmatpush1.msra.mxu0 0.0
    %104 = vmatprep.subr.mxu0 0.0
    %105 = vmatpush1.msra.mxu0 0.0
    %106 = vmatprep.subr.mxu0 0.0
    %107 = vmatpush1.msra.mxu0 0.0
    %108 = vmatprep.subr.mxu0 0.0
    %109 = vmatpush1.msra.mxu0 0.0
    %110 = vmatprep.subr.mxu0 0.0
    %111 = vmatpush1.msra.mxu0 0.0
    %112 = vmatprep.subr.mxu0 0.0
    %113 = vmatpush1.msra.mxu0 0.0
    %114 = vmatprep.subr.mxu0 0.0
    %115 = vmatpush1.msra.mxu0 %v75
    %116 = vmatprep.subr.mxu0 0.0
    %117 = vmatpush1.msra.mxu0 %v74
    %118 = vmatprep.subr.mxu0 0.0
    %119 = vmatpush1.msra.mxu0 %v73
    %120 = vmatprep.subr.mxu0 0.0
    %121 = vmatpush1.msra.mxu0 %v72
    %122 = vmatprep.subr.mxu0 0.0
    %123 = vmatpush2.msra.mxu0 0.0
    %124 = vmatprep.subr.mxu0 0.0
    %125 = vmatpush2.msra.mxu0 0.0
    %126 = vmatprep.subr.mxu0 0.0
    %127 = vmatpush2.msra.mxu0 0.0
    %128 = vmatprep.subr.mxu0 0.0
    %129 = vmatpush2.msra.mxu0 0.0
    %130 = vmatprep.subr.mxu0 0.0
    %131 = vmatpush2.msra.mxu0 0.0
    %132 = vmatprep.subr.mxu0 0.0
    %133 = vmatpush2.msra.mxu0 0.0
    %134 = vmatprep.subr.mxu0 0.0
    %135 = vmatpush2.msra.mxu0 0.0
    %136 = vmatprep.subr.mxu0 0.0
    %137 = vmatpush2.msra.mxu0 0.0
    %138 = vmatprep.subr.mxu0 0.0
    %139 = vmatpush2.msra.mxu0 0.0
    %140 = vmatprep.subr.mxu0 0.0
    %141 = vmatpush2.msra.mxu0 0.0
    %142 = vmatprep.subr.mxu0 0.0
    %143 = vmatpush2.msra.mxu0 0.0
    %144 = vmatprep.subr.mxu0 0.0
    %145 = vmatpush2.msra.mxu0 0.0
    %146 = vmatprep.subr.mxu0 0.0
    %147 = vmatpush2.msra.mxu0 0.0
    %148 = vmatprep.subr.mxu0 0.0
    %149 = vmatpush2.msra.mxu0 0.0
    %150 = vmatprep.subr.mxu0 0.0
    %151 = vmatpush2.msra.mxu0 0.0
    %152 = vmatprep.subr.mxu0 0.0
    %153 = vmatpush2.msra.mxu0 0.0
    %154 = vmatprep.mubr.f32.mxu0 0.0
    %155 = vmatmul.mubr.f32.gmra.mxu0 %v85
    %v156 = vpop.f32.mrf.mxu0
    %v157 = vadd.f32 %v81, %v156
    %v158 = vpop.f32.mrf.mxu0
    %159 = vmatprep.mubr.f32.mxu0 0.0
    %160 = vmatmul.mubr.f32.gmra.mxu0 %v88
    %v161 = vpop.f32.mrf.mxu0
    %v162 = vadd.f32 %v81, %v161
    %v163 = vpop.f32.mrf.mxu0
    %164 = vdwg.mxu0
    %vm165 = vcmask 130048
    %166 = vst.msk [vmem:[#allocation2] sm:$0xff] %vm165, %v157
    %167 = vst.msk [vmem:[#allocation2 + $0x8] sm:$0xff] %vm165, %v162
    %vm168 = vcmask 261254
    %169 = vst.msk [vmem:[#allocation2 - $0x6] sm:$0xc0] %vm168, %v162
    %vm170 = vcmask 259204
    %171 = vst.msk [vmem:[#allocation2 - $0x2] sm:$0x30] %vm170, %v162
    %vm172 = vcmask 257154
    %173 = vst.msk [vmem:[#allocation2 + $0x2] sm:$0xc] %vm172, %v162
    %vm174 = vcmask 255104
    %175 = vst.msk [vmem:[#allocation2 + $0x6] sm:$0x3] %vm174, %v162
    %176 = vst.msk [vmem:[#allocation2 + $0x2] sm:$0xc0] %vm168, %v157
    %177 = vst.msk [vmem:[#allocation2 + $0x6] sm:$0x30] %vm170, %v157
    %178 = vst.msk [vmem:[#allocation2 + $0xa] sm:$0xc] %vm172, %v157
    %179 = vst.msk [vmem:[#allocation2 + $0xe] sm:$0x3] %vm174, %v157
    %v180 = vld [vmem:[%s3] sm:$0xff]
    %v181 = vld [vmem:[%s3 + $0x8] sm:$0xff]
    %v182 = vld [vmem:[%s3 + $0x10] sm:$0xff]
    %v183 = vld [vmem:[%s3 + $0x18] sm:$0xff]
    %v184 = vld [vmem:[#allocation2] sm:$0x3]
    %v186 = vsel %vm83, 0.0, 0
    %188 = vmatprep.subr.mxu0 0.0
    %189 = vmatpush1.msra.mxu0 0.0
    %190 = vmatprep.subr.mxu0 0.0
    %191 = vmatpush1.msra.mxu0 0.0
    %192 = vmatprep.subr.mxu0 0.0
    %193 = vmatpush1.msra.mxu0 0.0
    %194 = vmatprep.subr.mxu0 0.0
    %195 = vmatpush1.msra.mxu0 0.0
    %196 = vmatprep.subr.mxu0 0.0
    %197 = vmatpush1.msra.mxu0 0.0
    %198 = vmatprep.subr.mxu0 0.0
    %199 = vmatpush1.msra.mxu0 0.0
    %200 = vmatprep.subr.mxu0 0.0
    %201 = vmatpush1.msra.mxu0 0.0
    %202 = vmatprep.subr.mxu0 0.0
    %203 = vmatpush1.msra.mxu0 0.0
    %204 = vmatprep.subr.mxu0 0.0
    %205 = vmatpush1.msra.mxu0 0.0
    %206 = vmatprep.subr.mxu0 0.0
    %207 = vmatpush1.msra.mxu0 0.0
    %208 = vmatprep.subr.mxu0 0.0
    %209 = vmatpush1.msra.mxu0 0.0
    %210 = vmatprep.subr.mxu0 0.0
    %211 = vmatpush1.msra.mxu0 0.0
    %212 = vmatprep.subr.mxu0 0.0
    %213 = vmatpush1.msra.mxu0 %v183
    %214 = vmatprep.subr.mxu0 0.0
    %215 = vmatpush1.msra.mxu0 %v182
    %216 = vmatprep.subr.mxu0 0.0
    %217 = vmatpush1.msra.mxu0 %v181
    %218 = vmatprep.subr.mxu0 0.0
    %219 = vmatpush1.msra.mxu0 %v180
    %220 = vmatprep.subr.mxu0 0.0
    %221 = vmatpush2.msra.mxu0 0.0
    %222 = vmatprep.subr.mxu0 0.0
    %223 = vmatpush2.msra.mxu0 0.0
    %224 = vmatprep.subr.mxu0 0.0
    %225 = vmatpush2.msra.mxu0 0.0
    %226 = vmatprep.subr.mxu0 0.0
    %227 = vmatpush2.msra.mxu0 0.0
    %228 = vmatprep.subr.mxu0 0.0
    %229 = vmatpush2.msra.mxu0 0.0
    %230 = vmatprep.subr.mxu0 0.0
    %231 = vmatpush2.msra.mxu0 0.0
    %232 = vmatprep.subr.mxu0 0.0
    %233 = vmatpush2.msra.mxu0 0.0
    %234 = vmatprep.subr.mxu0 0.0
    %235 = vmatpush2.msra.mxu0 0.0
    %236 = vmatprep.subr.mxu0 0.0
    %237 = vmatpush2.msra.mxu0 0.0
    %238 = vmatprep.subr.mxu0 0.0
    %239 = vmatpush2.msra.mxu0 0.0
    %240 = vmatprep.subr.mxu0 0.0
    %241 = vmatpush2.msra.mxu0 0.0
    %242 = vmatprep.subr.mxu0 0.0
    %243 = vmatpush2.msra.mxu0 0.0
    %244 = vmatprep.subr.mxu0 0.0
    %245 = vmatpush2.msra.mxu0 0.0
    %246 = vmatprep.subr.mxu0 0.0
    %247 = vmatpush2.msra.mxu0 0.0
    %248 = vmatprep.subr.mxu0 0.0
    %249 = vmatpush2.msra.mxu0 0.0
    %250 = vmatprep.subr.mxu0 0.0
    %251 = vmatpush2.msra.mxu0 0.0
    %252 = vmatprep.mubr.f32.mxu0 0.0
    %253 = vmatmul.mubr.f32.gmra.mxu0 %v186
    %v254 = vpop.f32.mrf.mxu0
    %v255 = vadd.f32 0.0, %v254
    %v256 = vpop.f32.mrf.mxu0
    %257 = vdwg.mxu0
    %v258 = vadd.f32 %v184, %v255
    %v259 = vtanh.pop %v258
    %vm260 = vcmask 123904
    %261 = vst.msk [vmem:[#allocation3] sm:$0x3] %vm260, %v259
    %262 = vst.msk [vmem:[#allocation3 + $0xe] sm:$0x3] %vm174, %v259
    %v263 = vld [vmem:[#allocation2 + $0x2] sm:$0x3]
    %v265 = vsel %vm83, %v259, 0
    %267 = vmatprep.subr.mxu0 0.0
    %268 = vmatpush1.msra.mxu0 0.0
    %269 = vmatprep.subr.mxu0 0.0
    %270 = vmatpush1.msra.mxu0 0.0
    %271 = vmatprep.subr.mxu0 0.0
    %272 = vmatpush1.msra.mxu0 0.0
    %273 = vmatprep.subr.mxu0 0.0
    %274 = vmatpush1.msra.mxu0 0.0
    %275 = vmatprep.subr.mxu0 0.0
    %276 = vmatpush1.msra.mxu0 0.0
    %277 = vmatprep.subr.mxu0 0.0
    %278 = vmatpush1.msra.mxu0 0.0
    %279 = vmatprep.subr.mxu0 0.0
    %280 = vmatpush1.msra.mxu0 0.0
    %281 = vmatprep.subr.mxu0 0.0
    %282 = vmatpush1.msra.mxu0 0.0
    %283 = vmatprep.subr.mxu0 0.0
    %284 = vmatpush1.msra.mxu0 0.0
    %285 = vmatprep.subr.mxu0 0.0
    %286 = vmatpush1.msra.mxu0 0.0
    %287 = vmatprep.subr.mxu0 0.0
    %288 = vmatpush1.msra.mxu0 0.0
    %289 = vmatprep.subr.mxu0 0.0
    %290 = vmatpush1.msra.mxu0 0.0
    %291 = vmatprep.subr.mxu0 0.0
    %292 = vmatpush1.msra.mxu0 %v183
    %293 = vmatprep.subr.mxu0 0.0
    %294 = vmatpush1.msra.mxu0 %v182
    %295 = vmatprep.subr.mxu0 0.0
    %296 = vmatpush1.msra.mxu0 %v181
    %297 = vmatprep.subr.mxu0 0.0
    %298 = vmatpush1.msra.mxu0 %v180
    %299 = vmatprep.subr.mxu0 0.0
    %300 = vmatpush2.msra.mxu0 0.0
    %301 = vmatprep.subr.mxu0 0.0
    %302 = vmatpush2.msra.mxu0 0.0
    %303 = vmatprep.subr.mxu0 0.0
    %304 = vmatpush2.msra.mxu0 0.0
    %305 = vmatprep.subr.mxu0 0.0
    %306 = vmatpush2.msra.mxu0 0.0
    %307 = vmatprep.subr.mxu0 0.0
    %308 = vmatpush2.msra.mxu0 0.0
    %309 = vmatprep.subr.mxu0 0.0
    %310 = vmatpush2.msra.mxu0 0.0
    %311 = vmatprep.subr.mxu0 0.0
    %312 = vmatpush2.msra.mxu0 0.0
    %313 = vmatprep.subr.mxu0 0.0
    %314 = vmatpush2.msra.mxu0 0.0
    %315 = vmatprep.subr.mxu0 0.0
    %316 = vmatpush2.msra.mxu0 0.0
    %317 = vmatprep.subr.mxu0 0.0
    %318 = vmatpush2.msra.mxu0 0.0
    %319 = vmatprep.subr.mxu0 0.0
    %320 = vmatpush2.msra.mxu0 0.0
    %321 = vmatprep.subr.mxu0 0.0
    %322 = vmatpush2.msra.mxu0 0.0
    %323 = vmatprep.subr.mxu0 0.0
    %324 = vmatpush2.msra.mxu0 0.0
    %325 = vmatprep.subr.mxu0 0.0
    %326 = vmatpush2.msra.mxu0 0.0
    %327 = vmatprep.subr.mxu0 0.0
    %328 = vmatpush2.msra.mxu0 0.0
    %329 = vmatprep.subr.mxu0 0.0
    %330 = vmatpush2.msra.mxu0 0.0
    %331 = vmatprep.mubr.f32.mxu0 0.0
    %332 = vmatmul.mubr.f32.gmra.mxu0 %v265
    %v333 = vpop.f32.mrf.mxu0
    %v334 = vadd.f32 0.0, %v333
    %v335 = vpop.f32.mrf.mxu0
    %336 = vdwg.mxu0
    %v337 = vadd.f32 %v263, %v334
    %v338 = vtanh.pop %v337
    %339 = vst.msk [vmem:[#allocation3 + $0x2] sm:$0x3] %vm260, %v338
    %340 = vst.msk [vmem:[#allocation3 + $0xc] sm:$0x3] %vm174, %v338
    %v341 = vld [vmem:[#allocation2 + $0x4] sm:$0x3]
    %v343 = vsel %vm83, %v338, 0
    %345 = vmatprep.subr.mxu0 0.0
    %346 = vmatpush1.msra.mxu0 0.0
    %347 = vmatprep.subr.mxu0 0.0
    %348 = vmatpush1.msra.mxu0 0.0
    %349 = vmatprep.subr.mxu0 0.0
    %350 = vmatpush1.msra.mxu0 0.0
    %351 = vmatprep.subr.mxu0 0.0
    %352 = vmatpush1.msra.mxu0 0.0
    %353 = vmatprep.subr.mxu0 0.0
    %354 = vmatpush1.msra.mxu0 0.0
    %355 = vmatprep.subr.mxu0 0.0
    %356 = vmatpush1.msra.mxu0 0.0
    %357 = vmatprep.subr.mxu0 0.0
    %358 = vmatpush1.msra.mxu0 0.0
    %359 = vmatprep.subr.mxu0 0.0
    %360 = vmatpush1.msra.mxu0 0.0
    %361 = vmatprep.subr.mxu0 0.0
    %362 = vmatpush1.msra.mxu0 0.0
    %363 = vmatprep.subr.mxu0 0.0
    %364 = vmatpush1.msra.mxu0 0.0
    %365 = vmatprep.subr.mxu0 0.0
    %366 = vmatpush1.msra.mxu0 0.0
    %367 = vmatprep.subr.mxu0 0.0
    %368 = vmatpush1.msra.mxu0 0.0
    %369 = vmatprep.subr.mxu0 0.0
    %370 = vmatpush1.msra.mxu0 %v183
    %371 = vmatprep.subr.mxu0 0.0
    %372 = vmatpush1.msra.mxu0 %v182
    %373 = vmatprep.subr.mxu0 0.0
    %374 = vmatpush1.msra.mxu0 %v181
    %375 = vmatprep.subr.mxu0 0.0
    %376 = vmatpush1.msra.mxu0 %v180
    %377 = vmatprep.subr.mxu0 0.0
    %378 = vmatpush2.msra.mxu0 0.0
    %379 = vmatprep.subr.mxu0 0.0
    %380 = vmatpush2.msra.mxu0 0.0
    %381 = vmatprep.subr.mxu0 0.0
    %382 = vmatpush2.msra.mxu0 0.0
    %383 = vmatprep.subr.mxu0 0.0
    %384 = vmatpush2.msra.mxu0 0.0
    %385 = vmatprep.subr.mxu0 0.0
    %386 = vmatpush2.msra.mxu0 0.0
    %387 = vmatprep.subr.mxu0 0.0
    %388 = vmatpush2.msra.mxu0 0.0
    %389 = vmatprep.subr.mxu0 0.0
    %390 = vmatpush2.msra.mxu0 0.0
    %391 = vmatprep.subr.mxu0 0.0
    %392 = vmatpush2.msra.mxu0 0.0
    %393 = vmatprep.subr.mxu0 0.0
    %394 = vmatpush2.msra.mxu0 0.0
    %395 = vmatprep.subr.mxu0 0.0
    %396 = vmatpush2.msra.mxu0 0.0
    %397 = vmatprep.subr.mxu0 0.0
    %398 = vmatpush2.msra.mxu0 0.0
    %399 = vmatprep.subr.mxu0 0.0
    %400 = vmatpush2.msra.mxu0 0.0
    %401 = vmatprep.subr.mxu0 0.0
    %402 = vmatpush2.msra.mxu0 0.0
    %403 = vmatprep.subr.mxu0 0.0
    %404 = vmatpush2.msra.mxu0 0.0
    %405 = vmatprep.subr.mxu0 0.0
    %406 = vmatpush2.msra.mxu0 0.0
    %407 = vmatprep.subr.mxu0 0.0
    %408 = vmatpush2.msra.mxu0 0.0
    %409 = vmatprep.mubr.f32.mxu0 0.0
    %410 = vmatmul.mubr.f32.gmra.mxu0 %v343
    %v411 = vpop.f32.mrf.mxu0
    %v412 = vadd.f32 0.0, %v411
    %v413 = vpop.f32.mrf.mxu0
    %414 = vdwg.mxu0
    %v415 = vadd.f32 %v341, %v412
    %v416 = vtanh.pop %v415
    %417 = vst.msk [vmem:[#allocation3 + $0x4] sm:$0x3] %vm260, %v416
    %418 = vst.msk [vmem:[#allocation3 + $0xa] sm:$0x3] %vm174, %v416
    %v419 = vld [vmem:[#allocation2 + $0x6] sm:$0x3]
    %v421 = vsel %vm83, %v416, 0
    %423 = vmatprep.subr.mxu0 0.0
    %424 = vmatpush1.msra.mxu0 0.0
    %425 = vmatprep.subr.mxu0 0.0
    %426 = vmatpush1.msra.mxu0 0.0
    %427 = vmatprep.subr.mxu0 0.0
    %428 = vmatpush1.msra.mxu0 0.0
    %429 = vmatprep.subr.mxu0 0.0
    %430 = vmatpush1.msra.mxu0 0.0
    %431 = vmatprep.subr.mxu0 0.0
    %432 = vmatpush1.msra.mxu0 0.0
    %433 = vmatprep.subr.mxu0 0.0
    %434 = vmatpush1.msra.mxu0 0.0
    %435 = vmatprep.subr.mxu0 0.0
    %436 = vmatpush1.msra.mxu0 0.0
    %437 = vmatprep.subr.mxu0 0.0
    %438 = vmatpush1.msra.mxu0 0.0
    %439 = vmatprep.subr.mxu0 0.0
    %440 = vmatpush1.msra.mxu0 0.0
    %441 = vmatprep.subr.mxu0 0.0
    %442 = vmatpush1.msra.mxu0 0.0
    %443 = vmatprep.subr.mxu0 0.0
    %444 = vmatpush1.msra.mxu0 0.0
    %445 = vmatprep.subr.mxu0 0.0
    %446 = vmatpush1.msra.mxu0 0.0
    %447 = vmatprep.subr.mxu0 0.0
    %448 = vmatpush1.msra.mxu0 %v183
    %449 = vmatprep.subr.mxu0 0.0
    %450 = vmatpush1.msra.mxu0 %v182
    %451 = vmatprep.subr.mxu0 0.0
    %452 = vmatpush1.msra.mxu0 %v181
    %453 = vmatprep.subr.mxu0 0.0
    %454 = vmatpush1.msra.mxu0 %v180
    %455 = vmatprep.subr.mxu0 0.0
    %456 = vmatpush2.msra.mxu0 0.0
    %457 = vmatprep.subr.mxu0 0.0
    %458 = vmatpush2.msra.mxu0 0.0
    %459 = vmatprep.subr.mxu0 0.0
    %460 = vmatpush2.msra.mxu0 0.0
    %461 = vmatprep.subr.mxu0 0.0
    %462 = vmatpush2.msra.mxu0 0.0
    %463 = vmatprep.subr.mxu0 0.0
    %464 = vmatpush2.msra.mxu0 0.0
    %465 = vmatprep.subr.mxu0 0.0
    %466 = vmatpush2.msra.mxu0 0.0
    %467 = vmatprep.subr.mxu0 0.0
    %468 = vmatpush2.msra.mxu0 0.0
    %469 = vmatprep.subr.mxu0 0.0
    %470 = vmatpush2.msra.mxu0 0.0
    %471 = vmatprep.subr.mxu0 0.0
    %472 = vmatpush2.msra.mxu0 0.0
    %473 = vmatprep.subr.mxu0 0.0
    %474 = vmatpush2.msra.mxu0 0.0
    %475 = vmatprep.subr.mxu0 0.0
    %476 = vmatpush2.msra.mxu0 0.0
    %477 = vmatprep.subr.mxu0 0.0
    %478 = vmatpush2.msra.mxu0 0.0
    %479 = vmatprep.subr.mxu0 0.0
    %480 = vmatpush2.msra.mxu0 0.0
    %481 = vmatprep.subr.mxu0 0.0
    %482 = vmatpush2.msra.mxu0 0.0
    %483 = vmatprep.subr.mxu0 0.0
    %484 = vmatpush2.msra.mxu0 0.0
    %485 = vmatprep.subr.mxu0 0.0
    %486 = vmatpush2.msra.mxu0 0.0
    %487 = vmatprep.mubr.f32.mxu0 0.0
    %488 = vmatmul.mubr.f32.gmra.mxu0 %v421
    %v489 = vpop.f32.mrf.mxu0
    %v490 = vadd.f32 0.0, %v489
    %v491 = vpop.f32.mrf.mxu0
    %492 = vdwg.mxu0
    %v493 = vadd.f32 %v419, %v490
    %v494 = vtanh.pop %v493
    %495 = vst.msk [vmem:[#allocation3 + $0x6] sm:$0x3] %vm260, %v494
    %496 = vst.msk [vmem:[#allocation3 + $0x8] sm:$0x3] %vm174, %v494
    %v497 = vld [vmem:[#allocation2 + $0x8] sm:$0x3]
    %v499 = vsel %vm83, %v494, 0
    %501 = vmatprep.subr.mxu0 0.0
    %502 = vmatpush1.msra.mxu0 0.0
    %503 = vmatprep.subr.mxu0 0.0
    %504 = vmatpush1.msra.mxu0 0.0
    %505 = vmatprep.subr.mxu0 0.0
    %506 = vmatpush1.msra.mxu0 0.0
    %507 = vmatprep.subr.mxu0 0.0
    %508 = vmatpush1.msra.mxu0 0.0
    %509 = vmatprep.subr.mxu0 0.0
    %510 = vmatpush1.msra.mxu0 0.0
    %511 = vmatprep.subr.mxu0 0.0
    %512 = vmatpush1.msra.mxu0 0.0
    %513 = vmatprep.subr.mxu0 0.0
    %514 = vmatpush1.msra.mxu0 0.0
    %515 = vmatprep.subr.mxu0 0.0
    %516 = vmatpush1.msra.mxu0 0.0
    %517 = vmatprep.subr.mxu0 0.0
    %518 = vmatpush1.msra.mxu0 0.0
    %519 = vmatprep.subr.mxu0 0.0
    %520 = vmatpush1.msra.mxu0 0.0
    %521 = vmatprep.subr.mxu0 0.0
    %522 = vmatpush1.msra.mxu0 0.0
    %523 = vmatprep.subr.mxu0 0.0
    %524 = vmatpush1.msra.mxu0 0.0
    %525 = vmatprep.subr.mxu0 0.0
    %526 = vmatpush1.msra.mxu0 %v183
    %527 = vmatprep.subr.mxu0 0.0
    %528 = vmatpush1.msra.mxu0 %v182
    %529 = vmatprep.subr.mxu0 0.0
    %530 = vmatpush1.msra.mxu0 %v181
    %531 = vmatprep.subr.mxu0 0.0
    %532 = vmatpush1.msra.mxu0 %v180
    %533 = vmatprep.subr.mxu0 0.0
    %534 = vmatpush2.msra.mxu0 0.0
    %535 = vmatprep.subr.mxu0 0.0
    %536 = vmatpush2.msra.mxu0 0.0
    %537 = vmatprep.subr.mxu0 0.0
    %538 = vmatpush2.msra.mxu0 0.0
    %539 = vmatprep.subr.mxu0 0.0
    %540 = vmatpush2.msra.mxu0 0.0
    %541 = vmatprep.subr.mxu0 0.0
    %542 = vmatpush2.msra.mxu0 0.0
    %543 = vmatprep.subr.mxu0 0.0
    %544 = vmatpush2.msra.mxu0 0.0
    %545 = vmatprep.subr.mxu0 0.0
    %546 = vmatpush2.msra.mxu0 0.0
    %547 = vmatprep.subr.mxu0 0.0
    %548 = vmatpush2.msra.mxu0 0.0
    %549 = vmatprep.subr.mxu0 0.0
    %550 = vmatpush2.msra.mxu0 0.0
    %551 = vmatprep.subr.mxu0 0.0
    %552 = vmatpush2.msra.mxu0 0.0
    %553 = vmatprep.subr.mxu0 0.0
    %554 = vmatpush2.msra.mxu0 0.0
    %555 = vmatprep.subr.mxu0 0.0
    %556 = vmatpush2.msra.mxu0 0.0
    %557 = vmatprep.subr.mxu0 0.0
    %558 = vmatpush2.msra.mxu0 0.0
    %559 = vmatprep.subr.mxu0 0.0
    %560 = vmatpush2.msra.mxu0 0.0
    %561 = vmatprep.subr.mxu0 0.0
    %562 = vmatpush2.msra.mxu0 0.0
    %563 = vmatprep.subr.mxu0 0.0
    %564 = vmatpush2.msra.mxu0 0.0
    %565 = vmatprep.mubr.f32.mxu0 0.0
    %566 = vmatmul.mubr.f32.gmra.mxu0 %v499
    %v567 = vpop.f32.mrf.mxu0
    %v568 = vadd.f32 0.0, %v567
    %v569 = vpop.f32.mrf.mxu0
    %570 = vdwg.mxu0
    %v571 = vadd.f32 %v497, %v568
    %v572 = vtanh.pop %v571
    %573 = vst.msk [vmem:[#allocation3 + $0x8] sm:$0x3] %vm260, %v572
    %574 = vst.msk [vmem:[#allocation3 + $0x6] sm:$0x3] %vm174, %v572
    %v575 = vld [vmem:[#allocation2 + $0xa] sm:$0x3]
    %v577 = vsel %vm83, %v572, 0
    %579 = vmatprep.subr.mxu0 0.0
    %580 = vmatpush1.msra.mxu0 0.0
    %581 = vmatprep.subr.mxu0 0.0
    %582 = vmatpush1.msra.mxu0 0.0
    %583 = vmatprep.subr.mxu0 0.0
    %584 = vmatpush1.msra.mxu0 0.0
    %585 = vmatprep.subr.mxu0 0.0
    %586 = vmatpush1.msra.mxu0 0.0
    %587 = vmatprep.subr.mxu0 0.0
    %588 = vmatpush1.msra.mxu0 0.0
    %589 = vmatprep.subr.mxu0 0.0
    %590 = vmatpush1.msra.mxu0 0.0
    %591 = vmatprep.subr.mxu0 0.0
    %592 = vmatpush1.msra.mxu0 0.0
    %593 = vmatprep.subr.mxu0 0.0
    %594 = vmatpush1.msra.mxu0 0.0
    %595 = vmatprep.subr.mxu0 0.0
    %596 = vmatpush1.msra.mxu0 0.0
    %597 = vmatprep.subr.mxu0 0.0
    %598 = vmatpush1.msra.mxu0 0.0
    %599 = vmatprep.subr.mxu0 0.0
    %600 = vmatpush1.msra.mxu0 0.0
    %601 = vmatprep.subr.mxu0 0.0
    %602 = vmatpush1.msra.mxu0 0.0
    %603 = vmatprep.subr.mxu0 0.0
    %604 = vmatpush1.msra.mxu0 %v183
    %605 = vmatprep.subr.mxu0 0.0
    %606 = vmatpush1.msra.mxu0 %v182
    %607 = vmatprep.subr.mxu0 0.0
    %608 = vmatpush1.msra.mxu0 %v181
    %609 = vmatprep.subr.mxu0 0.0
    %610 = vmatpush1.msra.mxu0 %v180
    %611 = vmatprep.subr.mxu0 0.0
    %612 = vmatpush2.msra.mxu0 0.0
    %613 = vmatprep.subr.mxu0 0.0
    %614 = vmatpush2.msra.mxu0 0.0
    %615 = vmatprep.subr.mxu0 0.0
    %616 = vmatpush2.msra.mxu0 0.0
    %617 = vmatprep.subr.mxu0 0.0
    %618 = vmatpush2.msra.mxu0 0.0
    %619 = vmatprep.subr.mxu0 0.0
    %620 = vmatpush2.msra.mxu0 0.0
    %621 = vmatprep.subr.mxu0 0.0
    %622 = vmatpush2.msra.mxu0 0.0
    %623 = vmatprep.subr.mxu0 0.0
    %624 = vmatpush2.msra.mxu0 0.0
    %625 = vmatprep.subr.mxu0 0.0
    %626 = vmatpush2.msra.mxu0 0.0
    %627 = vmatprep.subr.mxu0 0.0
    %628 = vmatpush2.msra.mxu0 0.0
    %629 = vmatprep.subr.mxu0 0.0
    %630 = vmatpush2.msra.mxu0 0.0
    %631 = vmatprep.subr.mxu0 0.0
    %632 = vmatpush2.msra.mxu0 0.0
    %633 = vmatprep.subr.mxu0 0.0
    %634 = vmatpush2.msra.mxu0 0.0
    %635 = vmatprep.subr.mxu0 0.0
    %636 = vmatpush2.msra.mxu0 0.0
    %637 = vmatprep.subr.mxu0 0.0
    %638 = vmatpush2.msra.mxu0 0.0
    %639 = vmatprep.subr.mxu0 0.0
    %640 = vmatpush2.msra.mxu0 0.0
    %641 = vmatprep.subr.mxu0 0.0
    %642 = vmatpush2.msra.mxu0 0.0
    %643 = vmatprep.mubr.f32.mxu0 0.0
    %644 = vmatmul.mubr.f32.gmra.mxu0 %v577
    %v645 = vpop.f32.mrf.mxu0
    %v646 = vadd.f32 0.0, %v645
    %v647 = vpop.f32.mrf.mxu0
    %648 = vdwg.mxu0
    %v649 = vadd.f32 %v575, %v646
    %v650 = vtanh.pop %v649
    %651 = vst.msk [vmem:[#allocation3 + $0xa] sm:$0x3] %vm260, %v650
    %652 = vst.msk [vmem:[#allocation3 + $0x4] sm:$0x3] %vm174, %v650
    %v653 = vld [vmem:[#allocation2 + $0xc] sm:$0x3]
    %v655 = vsel %vm83, %v650, 0
    %657 = vmatprep.subr.mxu0 0.0
    %658 = vmatpush1.msra.mxu0 0.0
    %659 = vmatprep.subr.mxu0 0.0
    %660 = vmatpush1.msra.mxu0 0.0
    %661 = vmatprep.subr.mxu0 0.0
    %662 = vmatpush1.msra.mxu0 0.0
    %663 = vmatprep.subr.mxu0 0.0
    %664 = vmatpush1.msra.mxu0 0.0
    %665 = vmatprep.subr.mxu0 0.0
    %666 = vmatpush1.msra.mxu0 0.0
    %667 = vmatprep.subr.mxu0 0.0
    %668 = vmatpush1.msra.mxu0 0.0
    %669 = vmatprep.subr.mxu0 0.0
    %670 = vmatpush1.msra.mxu0 0.0
    %671 = vmatprep.subr.mxu0 0.0
    %672 = vmatpush1.msra.mxu0 0.0
    %673 = vmatprep.subr.mxu0 0.0
    %674 = vmatpush1.msra.mxu0 0.0
    %675 = vmatprep.subr.mxu0 0.0
    %676 = vmatpush1.msra.mxu0 0.0
    %677 = vmatprep.subr.mxu0 0.0
    %678 = vmatpush1.msra.mxu0 0.0
    %679 = vmatprep.subr.mxu0 0.0
    %680 = vmatpush1.msra.mxu0 0.0
    %681 = vmatprep.subr.mxu0 0.0
    %682 = vmatpush1.msra.mxu0 %v183
    %683 = vmatprep.subr.mxu0 0.0
    %684 = vmatpush1.msra.mxu0 %v182
    %685 = vmatprep.subr.mxu0 0.0
    %686 = vmatpush1.msra.mxu0 %v181
    %687 = vmatprep.subr.mxu0 0.0
    %688 = vmatpush1.msra.mxu0 %v180
    %689 = vmatprep.subr.mxu0 0.0
    %690 = vmatpush2.msra.mxu0 0.0
    %691 = vmatprep.subr.mxu0 0.0
    %692 = vmatpush2.msra.mxu0 0.0
    %693 = vmatprep.subr.mxu0 0.0
    %694 = vmatpush2.msra.mxu0 0.0
    %695 = vmatprep.subr.mxu0 0.0
    %696 = vmatpush2.msra.mxu0 0.0
    %697 = vmatprep.subr.mxu0 0.0
    %698 = vmatpush2.msra.mxu0 0.0
    %699 = vmatprep.subr.mxu0 0.0
    %700 = vmatpush2.msra.mxu0 0.0
    %701 = vmatprep.subr.mxu0 0.0
    %702 = vmatpush2.msra.mxu0 0.0
    %703 = vmatprep.subr.mxu0 0.0
    %704 = vmatpush2.msra.mxu0 0.0
    %705 = vmatprep.subr.mxu0 0.0
    %706 = vmatpush2.msra.mxu0 0.0
    %707 = vmatprep.subr.mxu0 0.0
    %708 = vmatpush2.msra.mxu0 0.0
    %709 = vmatprep.subr.mxu0 0.0
    %710 = vmatpush2.msra.mxu0 0.0
    %711 = vmatprep.subr.mxu0 0.0
    %712 = vmatpush2.msra.mxu0 0.0
    %713 = vmatprep.subr.mxu0 0.0
    %714 = vmatpush2.msra.mxu0 0.0
    %715 = vmatprep.subr.mxu0 0.0
    %716 = vmatpush2.msra.mxu0 0.0
    %717 = vmatprep.subr.mxu0 0.0
    %718 = vmatpush2.msra.mxu0 0.0
    %719 = vmatprep.subr.mxu0 0.0
    %720 = vmatpush2.msra.mxu0 0.0
    %721 = vmatprep.mubr.f32.mxu0 0.0
    %722 = vmatmul.mubr.f32.gmra.mxu0 %v655
    %v723 = vpop.f32.mrf.mxu0
    %v724 = vadd.f32 0.0, %v723
    %v725 = vpop.f32.mrf.mxu0
    %726 = vdwg.mxu0
    %v727 = vadd.f32 %v653, %v724
    %v728 = vtanh.pop %v727
    %729 = vst.msk [vmem:[#allocation3 + $0xc] sm:$0x3] %vm260, %v728
    %730 = vst.msk [vmem:[#allocation3 + $0x2] sm:$0x3] %vm174, %v728
    %v731 = vld [vmem:[#allocation2 + $0xe] sm:$0x3]
    %v733 = vsel %vm83, %v728, 0
    %735 = vmatprep.subr.mxu0 0.0
    %736 = vmatpush1.msra.mxu0 0.0
    %737 = vmatprep.subr.mxu0 0.0
    %738 = vmatpush1.msra.mxu0 0.0
    %739 = vmatprep.subr.mxu0 0.0
    %740 = vmatpush1.msra.mxu0 0.0
    %741 = vmatprep.subr.mxu0 0.0
    %742 = vmatpush1.msra.mxu0 0.0
    %743 = vmatprep.subr.mxu0 0.0
    %744 = vmatpush1.msra.mxu0 0.0
    %745 = vmatprep.subr.mxu0 0.0
    %746 = vmatpush1.msra.mxu0 0.0
    %747 = vmatprep.subr.mxu0 0.0
    %748 = vmatpush1.msra.mxu0 0.0
    %749 = vmatprep.subr.mxu0 0.0
    %750 = vmatpush1.msra.mxu0 0.0
    %751 = vmatprep.subr.mxu0 0.0
    %752 = vmatpush1.msra.mxu0 0.0
    %753 = vmatprep.subr.mxu0 0.0
    %754 = vmatpush1.msra.mxu0 0.0
    %755 = vmatprep.subr.mxu0 0.0
    %756 = vmatpush1.msra.mxu0 0.0
    %757 = vmatprep.subr.mxu0 0.0
    %758 = vmatpush1.msra.mxu0 0.0
    %759 = vmatprep.subr.mxu0 0.0
    %760 = vmatpush1.msra.mxu0 %v183
    %761 = vmatprep.subr.mxu0 0.0
    %762 = vmatpush1.msra.mxu0 %v182
    %763 = vmatprep.subr.mxu0 0.0
    %764 = vmatpush1.msra.mxu0 %v181
    %765 = vmatprep.subr.mxu0 0.0
    %766 = vmatpush1.msra.mxu0 %v180
    %767 = vmatprep.subr.mxu0 0.0
    %768 = vmatpush2.msra.mxu0 0.0
    %769 = vmatprep.subr.mxu0 0.0
    %770 = vmatpush2.msra.mxu0 0.0
    %771 = vmatprep.subr.mxu0 0.0
    %772 = vmatpush2.msra.mxu0 0.0
    %773 = vmatprep.subr.mxu0 0.0
    %774 = vmatpush2.msra.mxu0 0.0
    %775 = vmatprep.subr.mxu0 0.0
    %776 = vmatpush2.msra.mxu0 0.0
    %777 = vmatprep.subr.mxu0 0.0
    %778 = vmatpush2.msra.mxu0 0.0
    %779 = vmatprep.subr.mxu0 0.0
    %780 = vmatpush2.msra.mxu0 0.0
    %781 = vmatprep.subr.mxu0 0.0
    %782 = vmatpush2.msra.mxu0 0.0
    %783 = vmatprep.subr.mxu0 0.0
    %784 = vmatpush2.msra.mxu0 0.0
    %785 = vmatprep.subr.mxu0 0.0
    %786 = vmatpush2.msra.mxu0 0.0
    %787 = vmatprep.subr.mxu0 0.0
    %788 = vmatpush2.msra.mxu0 0.0
    %789 = vmatprep.subr.mxu0 0.0
    %790 = vmatpush2.msra.mxu0 0.0
    %791 = vmatprep.subr.mxu0 0.0
    %792 = vmatpush2.msra.mxu0 0.0
    %793 = vmatprep.subr.mxu0 0.0
    %794 = vmatpush2.msra.mxu0 0.0
    %795 = vmatprep.subr.mxu0 0.0
    %796 = vmatpush2.msra.mxu0 0.0
    %797 = vmatprep.subr.mxu0 0.0
    %798 = vmatpush2.msra.mxu0 0.0
    %799 = vmatprep.mubr.f32.mxu0 0.0
    %800 = vmatmul.mubr.f32.gmra.mxu0 %v733
    %v801 = vpop.f32.mrf.mxu0
    %v802 = vadd.f32 0.0, %v801
    %v803 = vpop.f32.mrf.mxu0
    %804 = vdwg.mxu0
    %v805 = vadd.f32 %v731, %v802
    %v806 = vtanh.pop %v805
    %807 = vst.msk [vmem:[#allocation3 + $0xe] sm:$0x3] %vm260, %v806
    %808 = vst.msk [vmem:[#allocation3] sm:$0x3] %vm174, %v806
    %v809 = vld [vmem:[#allocation3] sm:$0xff]
    %v810 = vld [vmem:[#allocation3 + $0x8] sm:$0xff]
    %v811 = vld [vmem:[%s2] sm:$0xff]
    %v812 = vld [vmem:[%s2 + $0x8] sm:$0xff]
    %v813 = vld [vmem:[%s2 + $0x10] sm:$0xff]
    %v814 = vld [vmem:[%s2 + $0x18] sm:$0xff]
    %v815 = vld [vmem:[%s6] sm:$0x1]
    %v817 = vlaneseq
    %v818 = vshrl.u32 %v817, 7
    %v819 = vsub.s32 0, %v818
    %v820 = vrot.slane %v815, %v819
    %v823 = vsel %vm83, %v809, 0
    %v826 = vsel %vm83, %v810, 0
    %828 = vmatprep.subr.mxu0 0.0
    %829 = vmatpush1.msra.mxu0 0.0
    %830 = vmatprep.subr.mxu0 0.0
    %831 = vmatpush1.msra.mxu0 0.0
    %832 = vmatprep.subr.mxu0 0.0
    %833 = vmatpush1.msra.mxu0 0.0
    %834 = vmatprep.subr.mxu0 0.0
    %835 = vmatpush1.msra.mxu0 0.0
    %836 = vmatprep.subr.mxu0 0.0
    %837 = vmatpush1.msra.mxu0 0.0
    %838 = vmatprep.subr.mxu0 0.0
    %839 = vmatpush1.msra.mxu0 0.0
    %840 = vmatprep.subr.mxu0 0.0
    %841 = vmatpush1.msra.mxu0 0.0
    %842 = vmatprep.subr.mxu0 0.0
    %843 = vmatpush1.msra.mxu0 0.0
    %844 = vmatprep.subr.mxu0 0.0
    %845 = vmatpush1.msra.mxu0 0.0
    %846 = vmatprep.subr.mxu0 0.0
    %847 = vmatpush1.msra.mxu0 0.0
    %848 = vmatprep.subr.mxu0 0.0
    %849 = vmatpush1.msra.mxu0 0.0
    %850 = vmatprep.subr.mxu0 0.0
    %851 = vmatpush1.msra.mxu0 0.0
    %852 = vmatprep.subr.mxu0 0.0
    %853 = vmatpush1.msra.mxu0 %v814
    %854 = vmatprep.subr.mxu0 0.0
    %855 = vmatpush1.msra.mxu0 %v813
    %856 = vmatprep.subr.mxu0 0.0
    %857 = vmatpush1.msra.mxu0 %v812
    %858 = vmatprep.subr.mxu0 0.0
    %859 = vmatpush1.msra.mxu0 %v811
    %860 = vmatprep.subr.mxu0 0.0
    %861 = vmatpush2.msra.mxu0 0.0
    %862 = vmatprep.subr.mxu0 0.0
    %863 = vmatpush2.msra.mxu0 0.0
    %864 = vmatprep.subr.mxu0 0.0
    %865 = vmatpush2.msra.mxu0 0.0
    %866 = vmatprep.subr.mxu0 0.0
    %867 = vmatpush2.msra.mxu0 0.0
    %868 = vmatprep.subr.mxu0 0.0
    %869 = vmatpush2.msra.mxu0 0.0
    %870 = vmatprep.subr.mxu0 0.0
    %871 = vmatpush2.msra.mxu0 0.0
    %872 = vmatprep.subr.mxu0 0.0
    %873 = vmatpush2.msra.mxu0 0.0
    %874 = vmatprep.subr.mxu0 0.0
    %875 = vmatpush2.msra.mxu0 0.0
    %876 = vmatprep.subr.mxu0 0.0
    %877 = vmatpush2.msra.mxu0 0.0
    %878 = vmatprep.subr.mxu0 0.0
    %879 = vmatpush2.msra.mxu0 0.0
    %880 = vmatprep.subr.mxu0 0.0
    %881 = vmatpush2.msra.mxu0 0.0
    %882 = vmatprep.subr.mxu0 0.0
    %883 = vmatpush2.msra.mxu0 0.0
    %884 = vmatprep.subr.mxu0 0.0
    %885 = vmatpush2.msra.mxu0 0.0
    %886 = vmatprep.subr.mxu0 0.0
    %887 = vmatpush2.msra.mxu0 0.0
    %888 = vmatprep.subr.mxu0 0.0
    %889 = vmatpush2.msra.mxu0 0.0
    %890 = vmatprep.subr.mxu0 0.0
    %891 = vmatpush2.msra.mxu0 0.0
    %892 = vmatprep.mubr.f32.mxu0 0.0
    %893 = vmatmul.mubr.f32.gmra.mxu0 %v823
    %v894 = vpop.f32.mrf.mxu0
    %v895 = vadd.f32 %v820, %v894
    %v896 = vpop.f32.mrf.mxu0
    %897 = vmatprep.mubr.f32.mxu0 0.0
    %898 = vmatmul.mubr.f32.gmra.mxu0 %v826
    %v899 = vpop.f32.mrf.mxu0
    %v900 = vadd.f32 %v820, %v899
    %v901 = vpop.f32.mrf.mxu0
    %902 = vdwg.mxu0
    %903 = vst.msk [vmem:[#allocation2] sm:$0xff] %vm165, %v895
    %904 = vst.msk [vmem:[#allocation2 + $0x8] sm:$0xff] %vm165, %v900
    %905 = vst.msk [vmem:[#allocation2 - $0x6] sm:$0xc0] %vm168, %v900
    %906 = vst.msk [vmem:[#allocation2 - $0x2] sm:$0x30] %vm170, %v900
    %907 = vst.msk [vmem:[#allocation2 + $0x2] sm:$0xc] %vm172, %v900
    %908 = vst.msk [vmem:[#allocation2 + $0x6] sm:$0x3] %vm174, %v900
    %909 = vst.msk [vmem:[#allocation2 + $0x2] sm:$0xc0] %vm168, %v895
    %910 = vst.msk [vmem:[#allocation2 + $0x6] sm:$0x30] %vm170, %v895
    %911 = vst.msk [vmem:[#allocation2 + $0xa] sm:$0xc] %vm172, %v895
    %912 = vst.msk [vmem:[#allocation2 + $0xe] sm:$0x3] %vm174, %v895
    %v913 = vld [vmem:[#allocation7] sm:$0xff]
    %v914 = vld [vmem:[#allocation7 + $0x8] sm:$0xff]
    %v915 = vld [vmem:[#allocation7 + $0x10] sm:$0xff]
    %v916 = vld [vmem:[#allocation7 + $0x18] sm:$0xff]
    %v917 = vld [vmem:[#allocation2] sm:$0x3]
    %918 = vmatprep.subr.mxu0 0.0
    %919 = vmatpush1.msra.mxu0 0.0
    %920 = vmatprep.subr.mxu0 0.0
    %921 = vmatpush1.msra.mxu0 0.0
    %922 = vmatprep.subr.mxu0 0.0
    %923 = vmatpush1.msra.mxu0 0.0
    %924 = vmatprep.subr.mxu0 0.0
    %925 = vmatpush1.msra.mxu0 0.0
    %926 = vmatprep.subr.mxu0 0.0
    %927 = vmatpush1.msra.mxu0 0.0
    %928 = vmatprep.subr.mxu0 0.0
    %929 = vmatpush1.msra.mxu0 0.0
    %930 = vmatprep.subr.mxu0 0.0
    %931 = vmatpush1.msra.mxu0 0.0
    %932 = vmatprep.subr.mxu0 0.0
    %933 = vmatpush1.msra.mxu0 0.0
    %934 = vmatprep.subr.mxu0 0.0
    %935 = vmatpush1.msra.mxu0 0.0
    %936 = vmatprep.subr.mxu0 0.0
    %937 = vmatpush1.msra.mxu0 0.0
    %938 = vmatprep.subr.mxu0 0.0
    %939 = vmatpush1.msra.mxu0 0.0
    %940 = vmatprep.subr.mxu0 0.0
    %941 = vmatpush1.msra.mxu0 0.0
    %942 = vmatprep.subr.mxu0 0.0
    %943 = vmatpush1.msra.mxu0 %v916
    %944 = vmatprep.subr.mxu0 0.0
    %945 = vmatpush1.msra.mxu0 %v915
    %946 = vmatprep.subr.mxu0 0.0
    %947 = vmatpush1.msra.mxu0 %v914
    %948 = vmatprep.subr.mxu0 0.0
    %949 = vmatpush1.msra.mxu0 %v913
    %950 = vmatprep.subr.mxu0 0.0
    %951 = vmatpush2.msra.mxu0 0.0
    %952 = vmatprep.subr.mxu0 0.0
    %953 = vmatpush2.msra.mxu0 0.0
    %954 = vmatprep.subr.mxu0 0.0
    %955 = vmatpush2.msra.mxu0 0.0
    %956 = vmatprep.subr.mxu0 0.0
    %957 = vmatpush2.msra.mxu0 0.0
    %958 = vmatprep.subr.mxu0 0.0
    %959 = vmatpush2.msra.mxu0 0.0
    %960 = vmatprep.subr.mxu0 0.0
    %961 = vmatpush2.msra.mxu0 0.0
    %962 = vmatprep.subr.mxu0 0.0
    %963 = vmatpush2.msra.mxu0 0.0
    %964 = vmatprep.subr.mxu0 0.0
    %965 = vmatpush2.msra.mxu0 0.0
    %966 = vmatprep.subr.mxu0 0.0
    %967 = vmatpush2.msra.mxu0 0.0
    %968 = vmatprep.subr.mxu0 0.0
    %969 = vmatpush2.msra.mxu0 0.0
    %970 = vmatprep.subr.mxu0 0.0
    %971 = vmatpush2.msra.mxu0 0.0
    %972 = vmatprep.subr.mxu0 0.0
    %973 = vmatpush2.msra.mxu0 0.0
    %974 = vmatprep.subr.mxu0 0.0
    %975 = vmatpush2.msra.mxu0 0.0
    %976 = vmatprep.subr.mxu0 0.0
    %977 = vmatpush2.msra.mxu0 0.0
    %978 = vmatprep.subr.mxu0 0.0
    %979 = vmatpush2.msra.mxu0 0.0
    %980 = vmatprep.subr.mxu0 0.0
    %981 = vmatpush2.msra.mxu0 0.0
    %982 = vmatprep.mubr.f32.mxu0 0.0
    %983 = vmatmul.mubr.f32.gmra.mxu0 %v186
    %v984 = vpop.f32.mrf.mxu0
    %v985 = vadd.f32 0.0, %v984
    %v986 = vpop.f32.mrf.mxu0
    %987 = vdwg.mxu0
    %v988 = vadd.f32 %v917, %v985
    %v989 = vtanh.pop %v988
    %v990 = vadd.f32 %v989, 0.0
    %v991 = vld [vmem:[#allocation2 + $0x2] sm:$0x3]
    %v993 = vsel %vm83, %v989, 0
    %995 = vmatprep.subr.mxu0 0.0
    %996 = vmatpush1.msra.mxu0 0.0
    %997 = vmatprep.subr.mxu0 0.0
    %998 = vmatpush1.msra.mxu0 0.0
    %999 = vmatprep.subr.mxu0 0.0
    %1000 = vmatpush1.msra.mxu0 0.0
    %1001 = vmatprep.subr.mxu0 0.0
    %1002 = vmatpush1.msra.mxu0 0.0
    %1003 = vmatprep.subr.mxu0 0.0
    %1004 = vmatpush1.msra.mxu0 0.0
    %1005 = vmatprep.subr.mxu0 0.0
    %1006 = vmatpush1.msra.mxu0 0.0
    %1007 = vmatprep.subr.mxu0 0.0
    %1008 = vmatpush1.msra.mxu0 0.0
    %1009 = vmatprep.subr.mxu0 0.0
    %1010 = vmatpush1.msra.mxu0 0.0
    %1011 = vmatprep.subr.mxu0 0.0
    %1012 = vmatpush1.msra.mxu0 0.0
    %1013 = vmatprep.subr.mxu0 0.0
    %1014 = vmatpush1.msra.mxu0 0.0
    %1015 = vmatprep.subr.mxu0 0.0
    %1016 = vmatpush1.msra.mxu0 0.0
    %1017 = vmatprep.subr.mxu0 0.0
    %1018 = vmatpush1.msra.mxu0 0.0
    %1019 = vmatprep.subr.mxu0 0.0
    %1020 = vmatpush1.msra.mxu0 %v916
    %1021 = vmatprep.subr.mxu0 0.0
    %1022 = vmatpush1.msra.mxu0 %v915
    %1023 = vmatprep.subr.mxu0 0.0
    %1024 = vmatpush1.msra.mxu0 %v914
    %1025 = vmatprep.subr.mxu0 0.0
    %1026 = vmatpush1.msra.mxu0 %v913
    %1027 = vmatprep.subr.mxu0 0.0
    %1028 = vmatpush2.msra.mxu0 0.0
    %1029 = vmatprep.subr.mxu0 0.0
    %1030 = vmatpush2.msra.mxu0 0.0
    %1031 = vmatprep.subr.mxu0 0.0
    %1032 = vmatpush2.msra.mxu0 0.0
    %1033 = vmatprep.subr.mxu0 0.0
    %1034 = vmatpush2.msra.mxu0 0.0
    %1035 = vmatprep.subr.mxu0 0.0
    %1036 = vmatpush2.msra.mxu0 0.0
    %1037 = vmatprep.subr.mxu0 0.0
    %1038 = vmatpush2.msra.mxu0 0.0
    %1039 = vmatprep.subr.mxu0 0.0
    %1040 = vmatpush2.msra.mxu0 0.0
    %1041 = vmatprep.subr.mxu0 0.0
    %1042 = vmatpush2.msra.mxu0 0.0
    %1043 = vmatprep.subr.mxu0 0.0
    %1044 = vmatpush2.msra.mxu0 0.0
    %1045 = vmatprep.subr.mxu0 0.0
    %1046 = vmatpush2.msra.mxu0 0.0
    %1047 = vmatprep.subr.mxu0 0.0
    %1048 = vmatpush2.msra.mxu0 0.0
    %1049 = vmatprep.subr.mxu0 0.0
    %1050 = vmatpush2.msra.mxu0 0.0
    %1051 = vmatprep.subr.mxu0 0.0
    %1052 = vmatpush2.msra.mxu0 0.0
    %1053 = vmatprep.subr.mxu0 0.0
    %1054 = vmatpush2.msra.mxu0 0.0
    %1055 = vmatprep.subr.mxu0 0.0
    %1056 = vmatpush2.msra.mxu0 0.0
    %1057 = vmatprep.subr.mxu0 0.0
    %1058 = vmatpush2.msra.mxu0 0.0
    %1059 = vmatprep.mubr.f32.mxu0 0.0
    %1060 = vmatmul.mubr.f32.gmra.mxu0 %v993
    %v1061 = vpop.f32.mrf.mxu0
    %v1062 = vadd.f32 0.0, %v1061
    %v1063 = vpop.f32.mrf.mxu0
    %1064 = vdwg.mxu0
    %v1065 = vadd.f32 %v991, %v1062
    %v1066 = vtanh.pop %v1065
    %v1067 = vadd.f32 %v990, %v1066
    %v1068 = vld [vmem:[#allocation2 + $0x4] sm:$0x3]
    %v1070 = vsel %vm83, %v1066, 0
    %1072 = vmatprep.subr.mxu0 0.0
    %1073 = vmatpush1.msra.mxu0 0.0
    %1074 = vmatprep.subr.mxu0 0.0
    %1075 = vmatpush1.msra.mxu0 0.0
    %1076 = vmatprep.subr.mxu0 0.0
    %1077 = vmatpush1.msra.mxu0 0.0
    %1078 = vmatprep.subr.mxu0 0.0
    %1079 = vmatpush1.msra.mxu0 0.0
    %1080 = vmatprep.subr.mxu0 0.0
    %1081 = vmatpush1.msra.mxu0 0.0
    %1082 = vmatprep.subr.mxu0 0.0
    %1083 = vmatpush1.msra.mxu0 0.0
    %1084 = vmatprep.subr.mxu0 0.0
    %1085 = vmatpush1.msra.mxu0 0.0
    %1086 = vmatprep.subr.mxu0 0.0
    %1087 = vmatpush1.msra.mxu0 0.0
    %1088 = vmatprep.subr.mxu0 0.0
    %1089 = vmatpush1.msra.mxu0 0.0
    %1090 = vmatprep.subr.mxu0 0.0
    %1091 = vmatpush1.msra.mxu0 0.0
    %1092 = vmatprep.subr.mxu0 0.0
    %1093 = vmatpush1.msra.mxu0 0.0
    %1094 = vmatprep.subr.mxu0 0.0
    %1095 = vmatpush1.msra.mxu0 0.0
    %1096 = vmatprep.subr.mxu0 0.0
    %1097 = vmatpush1.msra.mxu0 %v916
    %1098 = vmatprep.subr.mxu0 0.0
    %1099 = vmatpush1.msra.mxu0 %v915
    %1100 = vmatprep.subr.mxu0 0.0
    %1101 = vmatpush1.msra.mxu0 %v914
    %1102 = vmatprep.subr.mxu0 0.0
    %1103 = vmatpush1.msra.mxu0 %v913
    %1104 = vmatprep.subr.mxu0 0.0
    %1105 = vmatpush2.msra.mxu0 0.0
    %1106 = vmatprep.subr.mxu0 0.0
    %1107 = vmatpush2.msra.mxu0 0.0
    %1108 = vmatprep.subr.mxu0 0.0
    %1109 = vmatpush2.msra.mxu0 0.0
    %1110 = vmatprep.subr.mxu0 0.0
    %1111 = vmatpush2.msra.mxu0 0.0
    %1112 = vmatprep.subr.mxu0 0.0
    %1113 = vmatpush2.msra.mxu0 0.0
    %1114 = vmatprep.subr.mxu0 0.0
    %1115 = vmatpush2.msra.mxu0 0.0
    %1116 = vmatprep.subr.mxu0 0.0
    %1117 = vmatpush2.msra.mxu0 0.0
    %1118 = vmatprep.subr.mxu0 0.0
    %1119 = vmatpush2.msra.mxu0 0.0
    %1120 = vmatprep.subr.mxu0 0.0
    %1121 = vmatpush2.msra.mxu0 0.0
    %1122 = vmatprep.subr.mxu0 0.0
    %1123 = vmatpush2.msra.mxu0 0.0
    %1124 = vmatprep.subr.mxu0 0.0
    %1125 = vmatpush2.msra.mxu0 0.0
    %1126 = vmatprep.subr.mxu0 0.0
    %1127 = vmatpush2.msra.mxu0 0.0
    %1128 = vmatprep.subr.mxu0 0.0
    %1129 = vmatpush2.msra.mxu0 0.0
    %1130 = vmatprep.subr.mxu0 0.0
    %1131 = vmatpush2.msra.mxu0 0.0
    %1132 = vmatprep.subr.mxu0 0.0
    %1133 = vmatpush2.msra.mxu0 0.0
    %1134 = vmatprep.subr.mxu0 0.0
    %1135 = vmatpush2.msra.mxu0 0.0
    %1136 = vmatprep.mubr.f32.mxu0 0.0
    %1137 = vmatmul.mubr.f32.gmra.mxu0 %v1070
    %v1138 = vpop.f32.mrf.mxu0
    %v1139 = vadd.f32 0.0, %v1138
    %v1140 = vpop.f32.mrf.mxu0
    %1141 = vdwg.mxu0
    %v1142 = vadd.f32 %v1068, %v1139
    %v1143 = vtanh.pop %v1142
    %v1144 = vadd.f32 %v1067, %v1143
    %v1145 = vld [vmem:[#allocation2 + $0x6] sm:$0x3]
    %v1147 = vsel %vm83, %v1143, 0
    %1149 = vmatprep.subr.mxu0 0.0
    %1150 = vmatpush1.msra.mxu0 0.0
    %1151 = vmatprep.subr.mxu0 0.0
    %1152 = vmatpush1.msra.mxu0 0.0
    %1153 = vmatprep.subr.mxu0 0.0
    %1154 = vmatpush1.msra.mxu0 0.0
    %1155 = vmatprep.subr.mxu0 0.0
    %1156 = vmatpush1.msra.mxu0 0.0
    %1157 = vmatprep.subr.mxu0 0.0
    %1158 = vmatpush1.msra.mxu0 0.0
    %1159 = vmatprep.subr.mxu0 0.0
    %1160 = vmatpush1.msra.mxu0 0.0
    %1161 = vmatprep.subr.mxu0 0.0
    %1162 = vmatpush1.msra.mxu0 0.0
    %1163 = vmatprep.subr.mxu0 0.0
    %1164 = vmatpush1.msra.mxu0 0.0
    %1165 = vmatprep.subr.mxu0 0.0
    %1166 = vmatpush1.msra.mxu0 0.0
    %1167 = vmatprep.subr.mxu0 0.0
    %1168 = vmatpush1.msra.mxu0 0.0
    %1169 = vmatprep.subr.mxu0 0.0
    %1170 = vmatpush1.msra.mxu0 0.0
    %1171 = vmatprep.subr.mxu0 0.0
    %1172 = vmatpush1.msra.mxu0 0.0
    %1173 = vmatprep.subr.mxu0 0.0
    %1174 = vmatpush1.msra.mxu0 %v916
    %1175 = vmatprep.subr.mxu0 0.0
    %1176 = vmatpush1.msra.mxu0 %v915
    %1177 = vmatprep.subr.mxu0 0.0
    %1178 = vmatpush1.msra.mxu0 %v914
    %1179 = vmatprep.subr.mxu0 0.0
    %1180 = vmatpush1.msra.mxu0 %v913
    %1181 = vmatprep.subr.mxu0 0.0
    %1182 = vmatpush2.msra.mxu0 0.0
    %1183 = vmatprep.subr.mxu0 0.0
    %1184 = vmatpush2.msra.mxu0 0.0
    %1185 = vmatprep.subr.mxu0 0.0
    %1186 = vmatpush2.msra.mxu0 0.0
    %1187 = vmatprep.subr.mxu0 0.0
    %1188 = vmatpush2.msra.mxu0 0.0
    %1189 = vmatprep.subr.mxu0 0.0
    %1190 = vmatpush2.msra.mxu0 0.0
    %1191 = vmatprep.subr.mxu0 0.0
    %1192 = vmatpush2.msra.mxu0 0.0
    %1193 = vmatprep.subr.mxu0 0.0
    %1194 = vmatpush2.msra.mxu0 0.0
    %1195 = vmatprep.subr.mxu0 0.0
    %1196 = vmatpush2.msra.mxu0 0.0
    %1197 = vmatprep.subr.mxu0 0.0
    %1198 = vmatpush2.msra.mxu0 0.0
    %1199 = vmatprep.subr.mxu0 0.0
    %1200 = vmatpush2.msra.mxu0 0.0
    %1201 = vmatprep.subr.mxu0 0.0
    %1202 = vmatpush2.msra.mxu0 0.0
    %1203 = vmatprep.subr.mxu0 0.0
    %1204 = vmatpush2.msra.mxu0 0.0
    %1205 = vmatprep.subr.mxu0 0.0
    %1206 = vmatpush2.msra.mxu0 0.0
    %1207 = vmatprep.subr.mxu0 0.0
    %1208 = vmatpush2.msra.mxu0 0.0
    %1209 = vmatprep.subr.mxu0 0.0
    %1210 = vmatpush2.msra.mxu0 0.0
    %1211 = vmatprep.subr.mxu0 0.0
    %1212 = vmatpush2.msra.mxu0 0.0
    %1213 = vmatprep.mubr.f32.mxu0 0.0
    %1214 = vmatmul.mubr.f32.gmra.mxu0 %v1147
    %v1215 = vpop.f32.mrf.mxu0
    %v1216 = vadd.f32 0.0, %v1215
    %v1217 = vpop.f32.mrf.mxu0
    %1218 = vdwg.mxu0
    %v1219 = vadd.f32 %v1145, %v1216
    %v1220 = vtanh.pop %v1219
    %v1221 = vadd.f32 %v1144, %v1220
    %v1222 = vld [vmem:[#allocation2 + $0x8] sm:$0x3]
    %v1224 = vsel %vm83, %v1220, 0
    %1226 = vmatprep.subr.mxu0 0.0
    %1227 = vmatpush1.msra.mxu0 0.0
    %1228 = vmatprep.subr.mxu0 0.0
    %1229 = vmatpush1.msra.mxu0 0.0
    %1230 = vmatprep.subr.mxu0 0.0
    %1231 = vmatpush1.msra.mxu0 0.0
    %1232 = vmatprep.subr.mxu0 0.0
    %1233 = vmatpush1.msra.mxu0 0.0
    %1234 = vmatprep.subr.mxu0 0.0
    %1235 = vmatpush1.msra.mxu0 0.0
    %1236 = vmatprep.subr.mxu0 0.0
    %1237 = vmatpush1.msra.mxu0 0.0
    %1238 = vmatprep.subr.mxu0 0.0
    %1239 = vmatpush1.msra.mxu0 0.0
    %1240 = vmatprep.subr.mxu0 0.0
    %1241 = vmatpush1.msra.mxu0 0.0
    %1242 = vmatprep.subr.mxu0 0.0
    %1243 = vmatpush1.msra.mxu0 0.0
    %1244 = vmatprep.subr.mxu0 0.0
    %1245 = vmatpush1.msra.mxu0 0.0
    %1246 = vmatprep.subr.mxu0 0.0
    %1247 = vmatpush1.msra.mxu0 0.0
    %1248 = vmatprep.subr.mxu0 0.0
    %1249 = vmatpush1.msra.mxu0 0.0
    %1250 = vmatprep.subr.mxu0 0.0
    %1251 = vmatpush1.msra.mxu0 %v916
    %1252 = vmatprep.subr.mxu0 0.0
    %1253 = vmatpush1.msra.mxu0 %v915
    %1254 = vmatprep.subr.mxu0 0.0
    %1255 = vmatpush1.msra.mxu0 %v914
    %1256 = vmatprep.subr.mxu0 0.0
    %1257 = vmatpush1.msra.mxu0 %v913
    %1258 = vmatprep.subr.mxu0 0.0
    %1259 = vmatpush2.msra.mxu0 0.0
    %1260 = vmatprep.subr.mxu0 0.0
    %1261 = vmatpush2.msra.mxu0 0.0
    %1262 = vmatprep.subr.mxu0 0.0
    %1263 = vmatpush2.msra.mxu0 0.0
    %1264 = vmatprep.subr.mxu0 0.0
    %1265 = vmatpush2.msra.mxu0 0.0
    %1266 = vmatprep.subr.mxu0 0.0
    %1267 = vmatpush2.msra.mxu0 0.0
    %1268 = vmatprep.subr.mxu0 0.0
    %1269 = vmatpush2.msra.mxu0 0.0
    %1270 = vmatprep.subr.mxu0 0.0
    %1271 = vmatpush2.msra.mxu0 0.0
    %1272 = vmatprep.subr.mxu0 0.0
    %1273 = vmatpush2.msra.mxu0 0.0
    %1274 = vmatprep.subr.mxu0 0.0
    %1275 = vmatpush2.msra.mxu0 0.0
    %1276 = vmatprep.subr.mxu0 0.0
    %1277 = vmatpush2.msra.mxu0 0.0
    %1278 = vmatprep.subr.mxu0 0.0
    %1279 = vmatpush2.msra.mxu0 0.0
    %1280 = vmatprep.subr.mxu0 0.0
    %1281 = vmatpush2.msra.mxu0 0.0
    %1282 = vmatprep.subr.mxu0 0.0
    %1283 = vmatpush2.msra.mxu0 0.0
    %1284 = vmatprep.subr.mxu0 0.0
    %1285 = vmatpush2.msra.mxu0 0.0
    %1286 = vmatprep.subr.mxu0 0.0
    %1287 = vmatpush2.msra.mxu0 0.0
    %1288 = vmatprep.subr.mxu0 0.0
    %1289 = vmatpush2.msra.mxu0 0.0
    %1290 = vmatprep.mubr.f32.mxu0 0.0
    %1291 = vmatmul.mubr.f32.gmra.mxu0 %v1224
    %v1292 = vpop.f32.mrf.mxu0
    %v1293 = vadd.f32 0.0, %v1292
    %v1294 = vpop.f32.mrf.mxu0
    %1295 = vdwg.mxu0
    %v1296 = vadd.f32 %v1222, %v1293
    %v1297 = vtanh.pop %v1296
    %v1298 = vadd.f32 %v1221, %v1297
    %v1299 = vld [vmem:[#allocation2 + $0xa] sm:$0x3]
    %v1301 = vsel %vm83, %v1297, 0
    %1303 = vmatprep.subr.mxu0 0.0
    %1304 = vmatpush1.msra.mxu0 0.0
    %1305 = vmatprep.subr.mxu0 0.0
    %1306 = vmatpush1.msra.mxu0 0.0
    %1307 = vmatprep.subr.mxu0 0.0
    %1308 = vmatpush1.msra.mxu0 0.0
    %1309 = vmatprep.subr.mxu0 0.0
    %1310 = vmatpush1.msra.mxu0 0.0
    %1311 = vmatprep.subr.mxu0 0.0
    %1312 = vmatpush1.msra.mxu0 0.0
    %1313 = vmatprep.subr.mxu0 0.0
    %1314 = vmatpush1.msra.mxu0 0.0
    %1315 = vmatprep.subr.mxu0 0.0
    %1316 = vmatpush1.msra.mxu0 0.0
    %1317 = vmatprep.subr.mxu0 0.0
    %1318 = vmatpush1.msra.mxu0 0.0
    %1319 = vmatprep.subr.mxu0 0.0
    %1320 = vmatpush1.msra.mxu0 0.0
    %1321 = vmatprep.subr.mxu0 0.0
    %1322 = vmatpush1.msra.mxu0 0.0
    %1323 = vmatprep.subr.mxu0 0.0
    %1324 = vmatpush1.msra.mxu0 0.0
    %1325 = vmatprep.subr.mxu0 0.0
    %1326 = vmatpush1.msra.mxu0 0.0
    %1327 = vmatprep.subr.mxu0 0.0
    %1328 = vmatpush1.msra.mxu0 %v916
    %1329 = vmatprep.subr.mxu0 0.0
    %1330 = vmatpush1.msra.mxu0 %v915
    %1331 = vmatprep.subr.mxu0 0.0
    %1332 = vmatpush1.msra.mxu0 %v914
    %1333 = vmatprep.subr.mxu0 0.0
    %1334 = vmatpush1.msra.mxu0 %v913
    %1335 = vmatprep.subr.mxu0 0.0
    %1336 = vmatpush2.msra.mxu0 0.0
    %1337 = vmatprep.subr.mxu0 0.0
    %1338 = vmatpush2.msra.mxu0 0.0
    %1339 = vmatprep.subr.mxu0 0.0
    %1340 = vmatpush2.msra.mxu0 0.0
    %1341 = vmatprep.subr.mxu0 0.0
    %1342 = vmatpush2.msra.mxu0 0.0
    %1343 = vmatprep.subr.mxu0 0.0
    %1344 = vmatpush2.msra.mxu0 0.0
    %1345 = vmatprep.subr.mxu0 0.0
    %1346 = vmatpush2.msra.mxu0 0.0
    %1347 = vmatprep.subr.mxu0 0.0
    %1348 = vmatpush2.msra.mxu0 0.0
    %1349 = vmatprep.subr.mxu0 0.0
    %1350 = vmatpush2.msra.mxu0 0.0
    %1351 = vmatprep.subr.mxu0 0.0
    %1352 = vmatpush2.msra.mxu0 0.0
    %1353 = vmatprep.subr.mxu0 0.0
    %1354 = vmatpush2.msra.mxu0 0.0
    %1355 = vmatprep.subr.mxu0 0.0
    %1356 = vmatpush2.msra.mxu0 0.0
    %1357 = vmatprep.subr.mxu0 0.0
    %1358 = vmatpush2.msra.mxu0 0.0
    %1359 = vmatprep.subr.mxu0 0.0
    %1360 = vmatpush2.msra.mxu0 0.0
    %1361 = vmatprep.subr.mxu0 0.0
    %1362 = vmatpush2.msra.mxu0 0.0
    %1363 = vmatprep.subr.mxu0 0.0
    %1364 = vmatpush2.msra.mxu0 0.0
    %1365 = vmatprep.subr.mxu0 0.0
    %1366 = vmatpush2.msra.mxu0 0.0
    %1367 = vmatprep.mubr.f32.mxu0 0.0
    %1368 = vmatmul.mubr.f32.gmra.mxu0 %v1301
    %v1369 = vpop.f32.mrf.mxu0
    %v1370 = vadd.f32 0.0, %v1369
    %v1371 = vpop.f32.mrf.mxu0
    %1372 = vdwg.mxu0
    %v1373 = vadd.f32 %v1299, %v1370
    %v1374 = vtanh.pop %v1373
    %v1375 = vadd.f32 %v1298, %v1374
    %v1376 = vld [vmem:[#allocation2 + $0xc] sm:$0x3]
    %v1378 = vsel %vm83, %v1374, 0
    %1380 = vmatprep.subr.mxu0 0.0
    %1381 = vmatpush1.msra.mxu0 0.0
    %1382 = vmatprep.subr.mxu0 0.0
    %1383 = vmatpush1.msra.mxu0 0.0
    %1384 = vmatprep.subr.mxu0 0.0
    %1385 = vmatpush1.msra.mxu0 0.0
    %1386 = vmatprep.subr.mxu0 0.0
    %1387 = vmatpush1.msra.mxu0 0.0
    %1388 = vmatprep.subr.mxu0 0.0
    %1389 = vmatpush1.msra.mxu0 0.0
    %1390 = vmatprep.subr.mxu0 0.0
    %1391 = vmatpush1.msra.mxu0 0.0
    %1392 = vmatprep.subr.mxu0 0.0
    %1393 = vmatpush1.msra.mxu0 0.0
    %1394 = vmatprep.subr.mxu0 0.0
    %1395 = vmatpush1.msra.mxu0 0.0
    %1396 = vmatprep.subr.mxu0 0.0
    %1397 = vmatpush1.msra.mxu0 0.0
    %1398 = vmatprep.subr.mxu0 0.0
    %1399 = vmatpush1.msra.mxu0 0.0
    %1400 = vmatprep.subr.mxu0 0.0
    %1401 = vmatpush1.msra.mxu0 0.0
    %1402 = vmatprep.subr.mxu0 0.0
    %1403 = vmatpush1.msra.mxu0 0.0
    %1404 = vmatprep.subr.mxu0 0.0
    %1405 = vmatpush1.msra.mxu0 %v916
    %1406 = vmatprep.subr.mxu0 0.0
    %1407 = vmatpush1.msra.mxu0 %v915
    %1408 = vmatprep.subr.mxu0 0.0
    %1409 = vmatpush1.msra.mxu0 %v914
    %1410 = vmatprep.subr.mxu0 0.0
    %1411 = vmatpush1.msra.mxu0 %v913
    %1412 = vmatprep.subr.mxu0 0.0
    %1413 = vmatpush2.msra.mxu0 0.0
    %1414 = vmatprep.subr.mxu0 0.0
    %1415 = vmatpush2.msra.mxu0 0.0
    %1416 = vmatprep.subr.mxu0 0.0
    %1417 = vmatpush2.msra.mxu0 0.0
    %1418 = vmatprep.subr.mxu0 0.0
    %1419 = vmatpush2.msra.mxu0 0.0
    %1420 = vmatprep.subr.mxu0 0.0
    %1421 = vmatpush2.msra.mxu0 0.0
    %1422 = vmatprep.subr.mxu0 0.0
    %1423 = vmatpush2.msra.mxu0 0.0
    %1424 = vmatprep.subr.mxu0 0.0
    %1425 = vmatpush2.msra.mxu0 0.0
    %1426 = vmatprep.subr.mxu0 0.0
    %1427 = vmatpush2.msra.mxu0 0.0
    %1428 = vmatprep.subr.mxu0 0.0
    %1429 = vmatpush2.msra.mxu0 0.0
    %1430 = vmatprep.subr.mxu0 0.0
    %1431 = vmatpush2.msra.mxu0 0.0
    %1432 = vmatprep.subr.mxu0 0.0
    %1433 = vmatpush2.msra.mxu0 0.0
    %1434 = vmatprep.subr.mxu0 0.0
    %1435 = vmatpush2.msra.mxu0 0.0
    %1436 = vmatprep.subr.mxu0 0.0
    %1437 = vmatpush2.msra.mxu0 0.0
    %1438 = vmatprep.subr.mxu0 0.0
    %1439 = vmatpush2.msra.mxu0 0.0
    %1440 = vmatprep.subr.mxu0 0.0
    %1441 = vmatpush2.msra.mxu0 0.0
    %1442 = vmatprep.subr.mxu0 0.0
    %1443 = vmatpush2.msra.mxu0 0.0
    %1444 = vmatprep.mubr.f32.mxu0 0.0
    %1445 = vmatmul.mubr.f32.gmra.mxu0 %v1378
    %v1446 = vpop.f32.mrf.mxu0
    %v1447 = vadd.f32 0.0, %v1446
    %v1448 = vpop.f32.mrf.mxu0
    %1449 = vdwg.mxu0
    %v1450 = vadd.f32 %v1376, %v1447
    %v1451 = vtanh.pop %v1450
    %v1452 = vadd.f32 %v1375, %v1451
    %v1453 = vld [vmem:[#allocation2 + $0xe] sm:$0x3]
    %v1455 = vsel %vm83, %v1451, 0
    %1457 = vmatprep.subr.mxu0 0.0
    %1458 = vmatpush1.msra.mxu0 0.0
    %1459 = vmatprep.subr.mxu0 0.0
    %1460 = vmatpush1.msra.mxu0 0.0
    %1461 = vmatprep.subr.mxu0 0.0
    %1462 = vmatpush1.msra.mxu0 0.0
    %1463 = vmatprep.subr.mxu0 0.0
    %1464 = vmatpush1.msra.mxu0 0.0
    %1465 = vmatprep.subr.mxu0 0.0
    %1466 = vmatpush1.msra.mxu0 0.0
    %1467 = vmatprep.subr.mxu0 0.0
    %1468 = vmatpush1.msra.mxu0 0.0
    %1469 = vmatprep.subr.mxu0 0.0
    %1470 = vmatpush1.msra.mxu0 0.0
    %1471 = vmatprep.subr.mxu0 0.0
    %1472 = vmatpush1.msra.mxu0 0.0
    %1473 = vmatprep.subr.mxu0 0.0
    %1474 = vmatpush1.msra.mxu0 0.0
    %1475 = vmatprep.subr.mxu0 0.0
    %1476 = vmatpush1.msra.mxu0 0.0
    %1477 = vmatprep.subr.mxu0 0.0
    %1478 = vmatpush1.msra.mxu0 0.0
    %1479 = vmatprep.subr.mxu0 0.0
    %1480 = vmatpush1.msra.mxu0 0.0
    %1481 = vmatprep.subr.mxu0 0.0
    %1482 = vmatpush1.msra.mxu0 %v916
    %1483 = vmatprep.subr.mxu0 0.0
    %1484 = vmatpush1.msra.mxu0 %v915
    %1485 = vmatprep.subr.mxu0 0.0
    %1486 = vmatpush1.msra.mxu0 %v914
    %1487 = vmatprep.subr.mxu0 0.0
    %1488 = vmatpush1.msra.mxu0 %v913
    %1489 = vmatprep.subr.mxu0 0.0
    %1490 = vmatpush2.msra.mxu0 0.0
    %1491 = vmatprep.subr.mxu0 0.0
    %1492 = vmatpush2.msra.mxu0 0.0
    %1493 = vmatprep.subr.mxu0 0.0
    %1494 = vmatpush2.msra.mxu0 0.0
    %1495 = vmatprep.subr.mxu0 0.0
    %1496 = vmatpush2.msra.mxu0 0.0
    %1497 = vmatprep.subr.mxu0 0.0
    %1498 = vmatpush2.msra.mxu0 0.0
    %1499 = vmatprep.subr.mxu0 0.0
    %1500 = vmatpush2.msra.mxu0 0.0
    %1501 = vmatprep.subr.mxu0 0.0
    %1502 = vmatpush2.msra.mxu0 0.0
    %1503 = vmatprep.subr.mxu0 0.0
    %1504 = vmatpush2.msra.mxu0 0.0
    %1505 = vmatprep.subr.mxu0 0.0
    %1506 = vmatpush2.msra.mxu0 0.0
    %1507 = vmatprep.subr.mxu0 0.0
    %1508 = vmatpush2.msra.mxu0 0.0
    %1509 = vmatprep.subr.mxu0 0.0
    %1510 = vmatpush2.msra.mxu0 0.0
    %1511 = vmatprep.subr.mxu0 0.0
    %1512 = vmatpush2.msra.mxu0 0.0
    %1513 = vmatprep.subr.mxu0 0.0
    %1514 = vmatpush2.msra.mxu0 0.0
    %1515 = vmatprep.subr.mxu0 0.0
    %1516 = vmatpush2.msra.mxu0 0.0
    %1517 = vmatprep.subr.mxu0 0.0
    %1518 = vmatpush2.msra.mxu0 0.0
    %1519 = vmatprep.subr.mxu0 0.0
    %1520 = vmatpush2.msra.mxu0 0.0
    %1521 = vmatprep.mubr.f32.mxu0 0.0
    %1522 = vmatmul.mubr.f32.gmra.mxu0 %v1455
    %v1523 = vpop.f32.mrf.mxu0
    %v1524 = vadd.f32 0.0, %v1523
    %v1525 = vpop.f32.mrf.mxu0
    %1526 = vdwg.mxu0
    %v1527 = vadd.f32 %v1453, %v1524
    %v1528 = vtanh.pop %v1527
    %v1529 = vadd.f32 %v1452, %v1528
    %v1530 = vmul.f32 %v1529, 0.125
    %v1531 = vld [vmem:[#allocation4] sm:$0xff]
    %v1532 = vld [vmem:[#allocation4 + $0x8] sm:$0xff]
    %v1533 = vld [vmem:[#allocation4 + $0x10] sm:$0xf]
    %v1534 = vld [vmem:[%s7] sm:$0xff]
    %v1535 = vld [vmem:[%s7 + $0x8] sm:$0xff]
    %v1536 = vld [vmem:[%s7 + $0x10] sm:$0xff]
    %v1537 = vld [vmem:[%s7 + $0x18] sm:$0xff]
    %v1539 = vsel %vm83, %v1531, 0
    %v1542 = vsel %vm83, %v1532, 0
    %v1545 = vsel %vm83, %v1533, 0
    %1547 = vmatprep.subr.mxu0 0.0
    %1548 = vmatpush1.msra.mxu0 0.0
    %1549 = vmatprep.subr.mxu0 0.0
    %1550 = vmatpush1.msra.mxu0 0.0
    %1551 = vmatprep.subr.mxu0 0.0
    %1552 = vmatpush1.msra.mxu0 0.0
    %1553 = vmatprep.subr.mxu0 0.0
    %1554 = vmatpush1.msra.mxu0 0.0
    %1555 = vmatprep.subr.mxu0 0.0
    %1556 = vmatpush1.msra.mxu0 0.0
    %1557 = vmatprep.subr.mxu0 0.0
    %1558 = vmatpush1.msra.mxu0 0.0
    %1559 = vmatprep.subr.mxu0 0.0
    %1560 = vmatpush1.msra.mxu0 0.0
    %1561 = vmatprep.subr.mxu0 0.0
    %1562 = vmatpush1.msra.mxu0 0.0
    %1563 = vmatprep.subr.mxu0 0.0
    %1564 = vmatpush1.msra.mxu0 0.0
    %1565 = vmatprep.subr.mxu0 0.0
    %1566 = vmatpush1.msra.mxu0 0.0
    %1567 = vmatprep.subr.mxu0 0.0
    %1568 = vmatpush1.msra.mxu0 0.0
    %1569 = vmatprep.subr.mxu0 0.0
    %1570 = vmatpush1.msra.mxu0 0.0
    %1571 = vmatprep.subr.mxu0 0.0
    %1572 = vmatpush1.msra.mxu0 %v1537
    %1573 = vmatprep.subr.mxu0 0.0
    %1574 = vmatpush1.msra.mxu0 %v1536
    %1575 = vmatprep.subr.mxu0 0.0
    %1576 = vmatpush1.msra.mxu0 %v1535
    %1577 = vmatprep.subr.mxu0 0.0
    %1578 = vmatpush1.msra.mxu0 %v1534
    %1579 = vmatprep.subr.mxu0 0.0
    %1580 = vmatpush2.msra.mxu0 0.0
    %1581 = vmatprep.subr.mxu0 0.0
    %1582 = vmatpush2.msra.mxu0 0.0
    %1583 = vmatprep.subr.mxu0 0.0
    %1584 = vmatpush2.msra.mxu0 0.0
    %1585 = vmatprep.subr.mxu0 0.0
    %1586 = vmatpush2.msra.mxu0 0.0
    %1587 = vmatprep.subr.mxu0 0.0
    %1588 = vmatpush2.msra.mxu0 0.0
    %1589 = vmatprep.subr.mxu0 0.0
    %1590 = vmatpush2.msra.mxu0 0.0
    %1591 = vmatprep.subr.mxu0 0.0
    %1592 = vmatpush2.msra.mxu0 0.0
    %1593 = vmatprep.subr.mxu0 0.0
    %1594 = vmatpush2.msra.mxu0 0.0
    %1595 = vmatprep.subr.mxu0 0.0
    %1596 = vmatpush2.msra.mxu0 0.0
    %1597 = vmatprep.subr.mxu0 0.0
    %1598 = vmatpush2.msra.mxu0 0.0
    %1599 = vmatprep.subr.mxu0 0.0
    %1600 = vmatpush2.msra.mxu0 0.0
    %1601 = vmatprep.subr.mxu0 0.0
    %1602 = vmatpush2.msra.mxu0 0.0
    %1603 = vmatprep.subr.mxu0 0.0
    %1604 = vmatpush2.msra.mxu0 0.0
    %1605 = vmatprep.subr.mxu0 0.0
    %1606 = vmatpush2.msra.mxu0 0.0
    %1607 = vmatprep.subr.mxu0 0.0
    %1608 = vmatpush2.msra.mxu0 0.0
    %1609 = vmatprep.subr.mxu0 0.0
    %1610 = vmatpush2.msra.mxu0 0.0
    %1611 = vmatprep.mubr.f32.mxu0 0.0
    %1612 = vmatmul.mubr.f32.gmra.mxu0 %v1539
    %v1613 = vpop.f32.mrf.mxu0
    %v1614 = vadd.f32 0.0, %v1613
    %v1615 = vpop.f32.mrf.mxu0
    %1616 = vmatprep.mubr.f32.mxu0 0.0
    %1617 = vmatmul.mubr.f32.gmra.mxu0 %v1542
    %v1618 = vpop.f32.mrf.mxu0
    %v1619 = vadd.f32 0.0, %v1618
    %v1620 = vpop.f32.mrf.mxu0
    %1621 = vmatprep.mubr.f32.mxu0 0.0
    %1622 = vmatmul.mubr.f32.gmra.mxu0 %v1545
    %v1623 = vpop.f32.mrf.mxu0
    %v1624 = vadd.f32 0.0, %v1623
    %v1625 = vpop.f32.mrf.mxu0
    %1626 = vdwg.mxu0
    %vm1629 = vcmask 1045504
    %v1630 = vrot.slane %v1614, 2
    %v1631 = vrot.slane %v1619, 2
    %v1632 = vsel %vm1629, %v1630, %v1631
    %1633 = vrot.lane.b32.xlu0 %v1632, 125
    %v1634 = vpop.permute.xlu0 %1633
    %1635 = vrot.lane.b32.xlu0 %v1631, 125
    %v1636 = vpop.permute.xlu0 %1635
    %v1639 = vadd.f32 %v1614, %v1634
    %v1640 = vadd.f32 %v1619, %v1636
    %vm1641 = vcmask 1043456
    %v1642 = vrot.slane %v1614, 4
    %v1643 = vrot.slane %v1619, 4
    %v1644 = vsel %vm1641, %v1642, %v1643
    %1645 = vrot.lane.b32.xlu0 %v1644, 122
    %v1646 = vpop.permute.xlu0 %1645
    %1647 = vrot.lane.b32.xlu0 %v1643, 122
    %v1648 = vpop.permute.xlu0 %1647
    %v1651 = vadd.f32 %v1639, %v1646
    %v1652 = vadd.f32 %v1640, %v1648
    %vm1654 = vcmask 1041408
    %v1655 = vrot.slane %v1614, 6
    %v1656 = vrot.slane %v1619, 6
    %v1657 = vsel %vm1654, %v1655, %v1656
    %v1658 = vrot.slane %v1624, 6
    %v1659 = vsel %vm1654, %v1656, %v1658
    %1660 = vrot.lane.b32.xlu0 %v1657, 119
    %v1661 = vpop.permute.xlu0 %1660
    %1662 = vrot.lane.b32.xlu0 %v1659, 119
    %v1663 = vpop.permute.xlu0 %1662
    %v1666 = vadd.f32 %v1651, %v1661
    %v1667 = vadd.f32 %v1652, %v1663
    %1668 = vrot.lane.b32.xlu0 %v1619, 116
    %v1669 = vpop.permute.xlu0 %1668
    %1670 = vrot.lane.b32.xlu0 %v1624, 116
    %v1671 = vpop.permute.xlu0 %1670
    %v1674 = vadd.f32 %v1666, %v1669
    %v1675 = vadd.f32 %v1667, %v1671
    %v1676 = vld [vmem:[%s8] sm:$0x1]
    %v1678 = vlaneseq
    %v1679 = vshrl.u32 %v1678, 7
    %v1680 = vsub.s32 0, %v1679
    %v1681 = vrot.slane %v1676, %v1680
    %v1683 = vadd.f32 %v1674, %v1681
    %v1684 = vadd.f32 %v1675, %v1681
    %v1685 = vmax.f32 %v1683, 0.0
    %v1686 = vmax.f32 %v1684, 0.0
    %v1687 = vld [vmem:[%s9] sm:$0xff]
    %v1688 = vld [vmem:[%s9 + $0x8] sm:$0xf]
    %vm1689 = vcmp.gt.f32.partialorder %v1687, 0.5
    %vm1690 = vcmp.gt.f32.partialorder %v1688, 0.5
    %v1691 = vsel %vm1689, %v1685, -inf
    %v1692 = vsel %vm1690, %v1686, -inf
    %v1694 = vrot.slane %v1691, 2
    %v1696 = vmax.f32 %v1691, %v1694
    %v1697 = vrot.slane %v1691, 4
    %v1699 = vmax.f32 %v1696, %v1697
    %v1700 = vrot.slane %v1691, 6
    %v1702 = vmax.f32 %v1699, %v1700
    %v1703 = vmax.f32 %v1702, %v1692
    %v1705 = vrot.slane %v1692, 2
    %v1707 = vmax.f32 %v1703, %v1705
    %v1708 = vld [vmem:[%s10] sm:$0xff]
    %v1709 = vld [vmem:[%s10 + $0x8] sm:$0xff]
    %v1710 = vld [vmem:[%s10 + $0x10] sm:$0xff]
    %v1711 = vld [vmem:[%s10 + $0x18] sm:$0xff]
    %v1712 = vld [vmem:[%s10 + $0x20] sm:$0x7]
    %1714 = vset.pattern.permute.xlu0 0
    %1715 = vperm.xlu0 %1714, %v1707
    %v1716 = vpop.permute.xlu0 %1715
    %v1718 = vlaneseq
    %v1719 = vshrl.u32 %v1718, 7
    %v1720 = vsub.s32 0, %v1719
    %v1721 = vrot.slane %v1708, %v1720
    %v1722 = vmul.f32 %v1716, %v1721
    %1723 = vset.pattern.permute.xlu0 1
    %1724 = vperm.xlu0 %1723, %v1707
    %v1725 = vpop.permute.xlu0 %1724
    %v1727 = vlaneseq
    %v1728 = vshrl.u32 %v1727, 7
    %v1729 = vsub.s32 1, %v1728
    %v1730 = vrot.slane %v1708, %v1729
    %v1731 = vmul.f32 %v1725, %v1730
    %v1732 = vadd.f32 %v1722, %v1731
    %1733 = vset.pattern.permute.xlu0 2
    %1734 = vperm.xlu0 %1733, %v1707
    %v1735 = vpop.permute.xlu0 %1734
    %v1737 = vlaneseq
    %v1738 = vshrl.u32 %v1737, 7
    %v1739 = vsub.s32 2, %v1738
    %v1740 = vrot.slane %v1708, %v1739
    %v1741 = vmul.f32 %v1735, %v1740
    %v1742 = vadd.f32 %v1732, %v1741
    %vm1748 = vcmask 1044480
    %v1749 = vrot.slane %v1708, 3
    %v1750 = vrot.slane %v1709, 3
    %v1751 = vsel %vm1748, %v1749, %v1750
    %v1752 = vrot.slane %v1710, 3
    %v1753 = vsel %vm1748, %v1750, %v1752
    %v1754 = vrot.slane %v1711, 3
    %v1755 = vsel %vm1748, %v1752, %v1754
    %v1756 = vrot.slane %v1712, 3
    %v1757 = vsel %vm1748, %v1754, %v1756
    %v1763 = vsel %vm83, %v1530, 0
    %1765 = vmatprep.subr.mxu0 0.0
    %1766 = vmatpush1.msra.mxu0 0.0
    %1767 = vmatprep.subr.mxu0 0.0
    %1768 = vmatpush1.msra.mxu0 0.0
    %1769 = vmatprep.subr.mxu0 0.0
    %1770 = vmatpush1.msra.mxu0 0.0
    %1771 = vmatprep.subr.mxu0 0.0
    %1772 = vmatpush1.msra.mxu0 0.0
    %1773 = vmatprep.subr.mxu0 0.0
    %1774 = vmatpush1.msra.mxu0 0.0
    %1775 = vmatprep.subr.mxu0 0.0
    %1776 = vmatpush1.msra.mxu0 0.0
    %1777 = vmatprep.subr.mxu0 0.0
    %1778 = vmatpush1.msra.mxu0 0.0
    %1779 = vmatprep.subr.mxu0 0.0
    %1780 = vmatpush1.msra.mxu0 0.0
    %1781 = vmatprep.subr.mxu0 0.0
    %1782 = vmatpush1.msra.mxu0 0.0
    %1783 = vmatprep.subr.mxu0 0.0
    %1784 = vmatpush1.msra.mxu0 0.0
    %1785 = vmatprep.subr.mxu0 0.0
    %1786 = vmatpush1.msra.mxu0 0.0
    %1787 = vmatprep.subr.mxu0 0.0
    %1788 = vmatpush1.msra.mxu0 0.0
    %1789 = vmatprep.subr.mxu0 0.0
    %1790 = vmatpush1.msra.mxu0 %v1757
    %1791 = vmatprep.subr.mxu0 0.0
    %1792 = vmatpush1.msra.mxu0 %v1755
    %1793 = vmatprep.subr.mxu0 0.0
    %1794 = vmatpush1.msra.mxu0 %v1753
    %1795 = vmatprep.subr.mxu0 0.0
    %1796 = vmatpush1.msra.mxu0 %v1751
    %1797 = vmatprep.subr.mxu0 0.0
    %1798 = vmatpush2.msra.mxu0 0.0
    %1799 = vmatprep.subr.mxu0 0.0
    %1800 = vmatpush2.msra.mxu0 0.0
    %1801 = vmatprep.subr.mxu0 0.0
    %1802 = vmatpush2.msra.mxu0 0.0
    %1803 = vmatprep.subr.mxu0 0.0
    %1804 = vmatpush2.msra.mxu0 0.0
    %1805 = vmatprep.subr.mxu0 0.0
    %1806 = vmatpush2.msra.mxu0 0.0
    %1807 = vmatprep.subr.mxu0 0.0
    %1808 = vmatpush2.msra.mxu0 0.0
    %1809 = vmatprep.subr.mxu0 0.0
    %1810 = vmatpush2.msra.mxu0 0.0
    %1811 = vmatprep.subr.mxu0 0.0
    %1812 = vmatpush2.msra.mxu0 0.0
    %1813 = vmatprep.subr.mxu0 0.0
    %1814 = vmatpush2.msra.mxu0 0.0
    %1815 = vmatprep.subr.mxu0 0.0
    %1816 = vmatpush2.msra.mxu0 0.0
    %1817 = vmatprep.subr.mxu0 0.0
    %1818 = vmatpush2.msra.mxu0 0.0
    %1819 = vmatprep.subr.mxu0 0.0
    %1820 = vmatpush2.msra.mxu0 0.0
    %1821 = vmatprep.subr.mxu0 0.0
    %1822 = vmatpush2.msra.mxu0 0.0
    %1823 = vmatprep.subr.mxu0 0.0
    %1824 = vmatpush2.msra.mxu0 0.0
    %1825 = vmatprep.subr.mxu0 0.0
    %1826 = vmatpush2.msra.mxu0 0.0
    %1827 = vmatprep.subr.mxu0 0.0
    %1828 = vmatpush2.msra.mxu0 0.0
    %1829 = vmatprep.mubr.f32.mxu0 0.0
    %1830 = vmatmul.mubr.f32.gmra.mxu0 %v1763
    %v1831 = vpop.f32.mrf.mxu0
    %v1832 = vadd.f32 0.0, %v1831
    %v1833 = vpop.f32.mrf.mxu0
    %1834 = vdwg.mxu0
    %v1835 = vadd.f32 %v1742, %v1832
    %v1836 = vld [vmem:[%s11] sm:$0x1]
    %v1838 = vlaneseq
    %v1839 = vshrl.u32 %v1838, 7
    %v1840 = vsub.s32 0, %v1839
    %v1841 = vrot.slane %v1836, %v1840
    %v1843 = vadd.f32 %v1835, %v1841
    %vm1844 = vcmask 17408
    %v1845 = vsel %vm1844, %v1843, -inf
    %1846 = vmax.xlane.f32.xlu0 %v1845
    %v1847 = vpop.xlane.xlu0 %1846
    %v1848 = vsub.f32 %v1843, %v1847
    %v1849 = vmul.f32 %v1848, 1.442695
    %v1850 = vpow.pop %v1849
    %v1851 = vsel %vm1844, %v1850, 0.0
    %1852 = vadd.xlane.f32.xlu0 %v1851
    %v1853 = vpop.xlane.xlu0 %1852
    %v1854 = vrcp.pop %v1853
    %v1855 = vmul.f32 %v1850, %v1854
    %1856 = vst.msk [vmem:[#allocation9] sm:$0x3] %vm1844, %v1855
    // Predicated region
    $region58: #{tpu_custom_call.1} parent=1 // pred_check
      _
    $region59: #{tpu_custom_call.1} parent=1 // pred_check_branch
      %1858 = sbr.rel (0) target = $region61
    $region60: #{tpu_custom_call.1} parent=1 // pred_region
      %s1860 = ssub.s32 32, 32
      %1861 = vsyncadd [#allocation6], %s1860
      %s1863 = sshll.u32 [#allocation9], 4
      %s1864 = int_to_ptr.vmem [resolvable:$true] %s1863
      %1866 = dma.vmem_to_hbm [thread:$0]  %s1864, 32, %s12, [#allocation6]
    $region61: #{tpu_custom_call.1} parent=1 // pred_fallthru
      _
    // Predicated region
    $region62: #{tpu_custom_call.1} parent=1 // pred_check
      _
    $region63: #{tpu_custom_call.1} parent=1 // pred_check_branch
      %1868 = sbr.rel (0) target = $region65
    $region64: #{tpu_custom_call.1} parent=1 // pred_region
      %1869 = dma.done [#allocation6], 32
    $region65: #{tpu_custom_call.1} parent=1 // pred_fallthru
      _
    %1870 = vsyncpa [#allocation5], 1
    %1871 = vsyncpa [#allocation8], 1
    %1872 = vsyncpa [#allocation6], 1

</llo_original>
